<compile_context>
chip_gen: v7x
topology: tpu7x:2x2x1
jax: 0.10.0
libtpu: 0.0.40
codegen_flags: <defaults>
</compile_context>

<pallas_src>
import functools
import math

import jax
import jax.numpy as jnp
from jax.experimental import pallas as pl
from jax.experimental.pallas import tpu as pltpu


_PAD = 256                                  # MXU-native alignment on v6e/v7x
_RESIDENT_B_MAX_BYTES = 8 * 1024 * 1024     # keep support VMEM-resident if <= this
_RESIDENT_B_MAX_COLS = 1024                 # and output-feature width <= this


# ---------------------------------------------------------------------------
# Helpers
# ---------------------------------------------------------------------------

def _round_up(n, m):
    return ((n + m - 1) // m) * m


def _pad2d(x, rows, cols):
    r, c = x.shape
    if r == rows and c == cols:
        return x                             # no-op when already aligned
    return jnp.pad(x, ((0, rows - r), (0, cols - c)))


def _pick_tile(dim, candidates, prefer_multi=False):
    """Largest candidate dividing dim; optionally require >= 2 tiles (megacore)."""
    if prefer_multi:
        for t in candidates:
            if dim % t == 0 and dim // t >= 2:
                return t
    for t in candidates:
        if dim % t == 0:
            return t
    return candidates[-1]                    # dims are padded to _PAD, always divides


@functools.lru_cache(maxsize=None)
def _vmem_limit_bytes():
    # Generation-aware scoped-VMEM limit: ~96 MiB on v5e/v6e (128 MiB physical),
    # ~48 MiB on v7x (64 MiB physical).  Conservative fallback if query fails.
    try:
        cap = int(pltpu.get_tpu_info().vmem_capacity_bytes)
        return max(32 * 1024 * 1024, min(cap - 16 * 1024 * 1024, 96 * 1024 * 1024))
    except Exception:
        return 32 * 1024 * 1024


# ---------------------------------------------------------------------------
# Kernels
# ---------------------------------------------------------------------------

def _matmul_kernel(*refs, has_bias):
    """o = a @ b (+ bias), f32 VMEM accumulation over the k grid axis."""
    if has_bias:
        a_ref, b_ref, bias_ref, o_ref, acc_ref = refs
    else:
        a_ref, b_ref, o_ref, acc_ref = refs
        bias_ref = None

    @pl.when(pl.program_id(2) == 0)
    def _():
        acc_ref[...] = jnp.zeros_like(acc_ref)

    acc_ref[...] += jnp.dot(a_ref[...], b_ref[...],
                            preferred_element_type=jnp.float32)

    @pl.when(pl.program_id(2) == pl.num_programs(2) - 1)
    def _():
        out = acc_ref[...]
        if bias_ref is not None:
            out = out + bias_ref[...].astype(jnp.float32)
        o_ref[...] = out.astype(o_ref.dtype)


def _matmul_resident_b_kernel(*refs, tk, has_bias):
    """o = a @ b (+ bias) with b fully VMEM-resident; k-slices taken in-kernel."""
    if has_bias:
        a_ref, b_ref, bias_ref, o_ref, acc_ref = refs
    else:
        a_ref, b_ref, o_ref, acc_ref = refs
        bias_ref = None
    k = pl.program_id(1)

    @pl.when(k == 0)
    def _():
        acc_ref[...] = jnp.zeros_like(acc_ref)

    koff = pl.multiple_of(k * tk, tk)
    acc_ref[...] += jnp.dot(a_ref[...], b_ref[pl.ds(koff, tk), :],
                            preferred_element_type=jnp.float32)

    @pl.when(k == pl.num_programs(1) - 1)
    def _():
        out = acc_ref[...]
        if bias_ref is not None:
            out = out + bias_ref[...].astype(jnp.float32)
        o_ref[...] = out.astype(o_ref.dtype)


# ---------------------------------------------------------------------------
# Tiled matmul wrappers (all dims must be multiples of _PAD; caller pads)
# ---------------------------------------------------------------------------

def _tiled_matmul(a, b, bias=None, out_dtype=None):
    """Generic (M,N,K)-grid tiled matmul. a: [M,K], b: [K,N], bias: [1,N] or None."""
    M, K = a.shape
    K2, N = b.shape
    assert K == K2, (a.shape, b.shape)
    out_dtype = out_dtype or a.dtype

    tm = _pick_tile(M, (512, 256), prefer_multi=True)   # >=2 row tiles for megacore
    tn = _pick_tile(N, (512, 256))
    tk = _pick_tile(K, (1024, 512, 256))
    grid = (M // tm, N // tn, K // tk)

    in_specs = [
        pl.BlockSpec((tm, tk), lambda i, j, k: (i, k)),
        pl.BlockSpec((tk, tn), lambda i, j, k: (k, j)),
    ]
    args = [a, b]
    if bias is not None:
        in_specs.append(pl.BlockSpec((1, tn), lambda i, j, k: (0, j)))
        args.append(bias)

    return pl.pallas_call(
        functools.partial(_matmul_kernel, has_bias=bias is not None),
        out_shape=jax.ShapeDtypeStruct((M, N), out_dtype),
        grid_spec=pltpu.PrefetchScalarGridSpec(
            num_scalar_prefetch=0,
            grid=grid,
            in_specs=in_specs,
            out_specs=pl.BlockSpec((tm, tn), lambda i, j, k: (i, j)),
            scratch_shapes=[pltpu.VMEM((tm, tn), jnp.float32)],
        ),
        compiler_params=pltpu.CompilerParams(
            dimension_semantics=("parallel", "parallel", "arbitrary"),
            vmem_limit_bytes=_vmem_limit_bytes(),
        ),
    )(*args)


def _matmul_resident_b(a, b, bias=None, out_dtype=None):
    """a @ b (+ bias) with b (= support) held fully in VMEM: DMA'd once, not
    re-streamed from HBM for every row tile of a."""
    M, K = a.shape
    K2, N = b.shape
    assert K == K2, (a.shape, b.shape)
    out_dtype = out_dtype or a.dtype

    tm = _pick_tile(M, (512, 256), prefer_multi=True)
    tk = _pick_tile(K, (1024, 512, 256))
    grid = (M // tm, K // tk)

    in_specs = [
        # TODO(synk): if xprof shows exposed DMA on the adj stream after the bf16
        #             switch, add pipeline_mode=pl.Buffered(3) here.
        pl.BlockSpec((tm, tk), lambda i, k: (i, k)),
        pl.BlockSpec((K, N), lambda i, k: (0, 0)),       # resident full-array B
    ]
    args = [a, b]
    if bias is not None:
        in_specs.append(pl.BlockSpec((1, N), lambda i, k: (0, 0)))
        args.append(bias)

    return pl.pallas_call(
        functools.partial(_matmul_resident_b_kernel, tk=tk,
                          has_bias=bias is not None),
        out_shape=jax.ShapeDtypeStruct((M, N), out_dtype),
        grid_spec=pltpu.PrefetchScalarGridSpec(
            num_scalar_prefetch=0,
            grid=grid,
            in_specs=in_specs,
            out_specs=pl.BlockSpec((tm, N), lambda i, k: (i, 0)),
            scratch_shapes=[pltpu.VMEM((tm, N), jnp.float32)],
        ),
        compiler_params=pltpu.CompilerParams(
            dimension_semantics=("parallel", "arbitrary"),
            vmem_limit_bytes=_vmem_limit_bytes(),
        ),
    )(*args)


# ---------------------------------------------------------------------------
# GCN layer forward
# ---------------------------------------------------------------------------

@functools.partial(jax.jit, static_argnames=("compute_dtype",))
def graph_convolution(x, adj, weight, bias=None, *, compute_dtype=jnp.bfloat16):
    """Pallas GCN layer: adj @ (x @ weight) + bias.

    x: [N, in_f], adj: [N, N] dense (already degree-normalized, f32),
    weight: [in_f, out_f], bias: [out_f] or None.  MXU inputs are cast to
    `compute_dtype` (bf16 by default); accumulation and bias add are f32.
    """
    out_dtype = x.dtype
    N, in_f = x.shape
    out_f = weight.shape[1]

    # Pad to 256 multiples: lane-dense outputs, 256-wide-MXU-friendly tiles.
    # Zero-padding is exact (padded rows/cols contribute nothing; sliced off).
    Np = _round_up(N, _PAD)
    Kp = _round_up(in_f, _PAD)
    Fp = _round_up(out_f, _PAD)

    # Cast AFTER upstream normalization (adj arrives degree-normalized in f32).
    # TODO(synk): for real GCNs pre-pad (and pre-cast) adj once upstream — it is
    #             reused every layer/step, so the full N^2 pad copy is avoidable.
    x_p = _pad2d(x.astype(compute_dtype), Np, Kp)
    w_p = _pad2d(weight.astype(compute_dtype), Kp, Fp)
    adj_p = _pad2d(adj.astype(compute_dtype), Np, Np)

    # Stage 1: support = x @ W  -> [Np, Fp], stored at compute_dtype.
    support = _tiled_matmul(x_p, w_p, out_dtype=compute_dtype)

    b_p = None
    if bias is not None:
        b_p = _pad2d(bias.reshape(1, out_f).astype(jnp.float32), 1, Fp)

    # Stage 2: out = adj @ support (+ bias).  Keep support VMEM-resident when it
    # fits (typical GCN hidden dims), otherwise fall back to the generic tiles.
    support_bytes = Np * Fp * jnp.dtype(compute_dtype).itemsize
    if Fp <= _RESIDENT_B_MAX_COLS and support_bytes <= _RESIDENT_B_MAX_BYTES:
        out_p = _matmul_resident_b(adj_p, support, bias=b_p, out_dtype=out_dtype)
    else:
        out_p = _tiled_matmul(adj_p, support, bias=b_p, out_dtype=out_dtype)

    return out_p[:N, :out_f]


# ---------------------------------------------------------------------------
# Demo / correctness check
# ---------------------------------------------------------------------------

def xavier_uniform(key, shape, dtype=jnp.float32):
    fan_in, fan_out = shape
    a = math.sqrt(6.0 / (fan_in + fan_out))
    return jax.random.uniform(key, shape, dtype=dtype, minval=-a, maxval=a)


def _make_adj(key, n):
    adj_raw = (jax.random.uniform(key, (n, n)) > 0.5).astype(jnp.float32)
    adj = adj_raw + jnp.eye(n, dtype=jnp.float32)
    deg = jnp.sum(adj, axis=1, keepdims=True)
    return adj / deg                          # degree-normalize in f32 (pre-cast)


if __name__ == "__main__":
    key = jax.random.PRNGKey(0)

    # --- Small demo shapes matching the module's forward ---------------------
    k_x, k_adj, k_w = jax.random.split(key, 3)
    N, in_features, out_features = 8, 32, 32

    x = jax.random.normal(k_x, (N, in_features), dtype=jnp.float32)
    adj = _make_adj(k_adj, N)
    weight = xavier_uniform(k_w, (in_features, out_features))
    bias = jnp.zeros((out_features,), dtype=jnp.float32)  # nn.init.constant_(bias, 0)

    ref = adj @ (x @ weight) + bias

    # Default bf16 MXU path (f32 accumulation).
    out = jax.block_until_ready(graph_convolution(x, adj, weight, bias))
    assert out.shape == (N, out_features)
    assert out.dtype == jnp.float32
    assert jnp.allclose(out, ref, atol=3e-2, rtol=3e-2), "mismatch (bf16 path)"

    # Exact-parity f32 path.
    out_f32 = jax.block_until_ready(
        graph_convolution(x, adj, weight, bias, compute_dtype=jnp.float32))
    assert jnp.allclose(out_f32, ref, atol=1e-5, rtol=1e-5), "mismatch (f32 path)"

    # bias=None path (bias-free kernel, no zero-bias DMA).
    out_nb = jax.block_until_ready(graph_convolution(x, adj, weight, None))
    ref_nb = adj @ (x @ weight)
    assert jnp.allclose(out_nb, ref_nb, atol=3e-2, rtol=3e-2), "mismatch (no-bias)"

    # --- Non-aligned shapes: exercise padding, tiling, residency gate --------
    k_x2, k_adj2, k_w2, k_b2 = jax.random.split(jax.random.PRNGKey(1), 4)
    N2, in2, out2 = 200, 96, 80
    x2 = jax.random.normal(k_x2, (N2, in2), dtype=jnp.float32)
    adj2 = _make_adj(k_adj2, N2)
    w2 = xavier_uniform(k_w2, (in2, out2))
    b2 = jax.random.normal(k_b2, (out2,), dtype=jnp.float32)

    ref2 = adj2 @ (x2 @ w2) + b2
    out2_ = jax.block_until_ready(graph_convolution(x2, adj2, w2, b2))
    assert out2_.shape == (N2, out2)
    assert jnp.allclose(out2_, ref2, atol=3e-2, rtol=3e-2), "mismatch (padded bf16)"

    out2_f32 = jax.block_until_ready(
        graph_convolution(x2, adj2, w2, b2, compute_dtype=jnp.float32))
    assert jnp.allclose(out2_f32, ref2, atol=1e-4, rtol=1e-4), "mismatch (padded f32)"

    print("KERNEL_OK")
</pallas_src>

<mosaic_0001>
module attributes {stable_mosaic.version = 11 : i64} {
  func.func @_matmul_kernel(%arg0: i32, %arg1: i32, %arg2: i32, %arg3: memref<256x256xbf16, #tpu.memory_space<vmem>>, %arg4: memref<256x256xbf16, #tpu.memory_space<vmem>>, %arg5: memref<256x256xbf16, #tpu.memory_space<vmem>>, %arg6: memref<256x256xf32, #tpu.memory_space<vmem>>) attributes {dimension_semantics = [#tpu.dimension_semantics<parallel>, #tpu.dimension_semantics<parallel>, #tpu.dimension_semantics<arbitrary>], iteration_bounds = array<i64: 1, 1, 1>, scalar_prefetch = 0 : i64, scratch_operands = 1 : i64, tpu.core_type = #tpu.core_type<tc>, window_params = [{transform_indices = @transform_0, window_bounds = array<i64: 256, 256>}, {transform_indices = @transform_1, window_bounds = array<i64: 256, 256>}, {transform_indices = @transform_2, window_bounds = array<i64: 256, 256>}]} {
    %c0_i32 = arith.constant 0 : i32
    %0 = arith.cmpi eq, %arg2, %c0_i32 : i32
    %1 = arith.extui %0 : i1 to i32
    %c0_i32_0 = arith.constant 0 : i32
    %2 = arith.cmpi ne, %1, %c0_i32_0 : i32
    scf.if %2 {
      %cst_10 = arith.constant 0.000000e+00 : f32
      %12 = vector.broadcast %cst_10 : f32 to vector<256x256xf32>
      %c0_11 = arith.constant 0 : index
      %c0_12 = arith.constant 0 : index
      %13 = vector.load %arg6[%c0_11, %c0_12] : memref<256x256xf32, #tpu.memory_space<vmem>>, vector<256x256xf32>
      tpu.vector_store %arg6[%c0_11, %c0_12], %12 {strides = array<i32>} : memref<256x256xf32, #tpu.memory_space<vmem>>, vector<256x256xf32>,
    } else {
    }
    %c0 = arith.constant 0 : index
    %c0_1 = arith.constant 0 : index
    %3 = vector.load %arg6[%c0, %c0_1] : memref<256x256xf32, #tpu.memory_space<vmem>>, vector<256x256xf32>
    %c0_2 = arith.constant 0 : index
    %c0_3 = arith.constant 0 : index
    %4 = vector.load %arg3[%c0_2, %c0_3] : memref<256x256xbf16, #tpu.memory_space<vmem>>, vector<256x256xbf16>
    %c0_4 = arith.constant 0 : index
    %c0_5 = arith.constant 0 : index
    %5 = vector.load %arg4[%c0_4, %c0_5] : memref<256x256xbf16, #tpu.memory_space<vmem>>, vector<256x256xbf16>
    %cst = arith.constant dense<0.000000e+00> : vector<256x256xf32>
    %6 = tpu.matmul %4, %5, %cst {dimension_numbers = #tpu.dot_dimension_numbers<[1], [0], [0], [1], [0, 0, 1, 1], [], []>} : vector<256x256xbf16>, vector<256x256xbf16>, vector<256x256xf32> -> vector<256x256xf32>
    %7 = arith.addf %3, %6 : vector<256x256xf32>
    %c0_6 = arith.constant 0 : index
    %c0_7 = arith.constant 0 : index
    %8 = vector.load %arg6[%c0_6, %c0_7] : memref<256x256xf32, #tpu.memory_space<vmem>>, vector<256x256xf32>
    tpu.vector_store %arg6[%c0_6, %c0_7], %7 {strides = array<i32>} : memref<256x256xf32, #tpu.memory_space<vmem>>, vector<256x256xf32>,
    %c0_i32_8 = arith.constant 0 : i32
    %9 = arith.cmpi eq, %arg2, %c0_i32_8 : i32
    %10 = arith.extui %9 : i1 to i32
    %c0_i32_9 = arith.constant 0 : i32
    %11 = arith.cmpi ne, %10, %c0_i32_9 : i32
    scf.if %11 {
      %c0_10 = arith.constant 0 : index
      %c0_11 = arith.constant 0 : index
      %12 = vector.load %arg6[%c0_10, %c0_11] : memref<256x256xf32, #tpu.memory_space<vmem>>, vector<256x256xf32>
      %13 = arith.truncf %12 : vector<256x256xf32> to vector<256x256xbf16>
      %c0_12 = arith.constant 0 : index
      %c0_13 = arith.constant 0 : index
      %14 = vector.load %arg5[%c0_12, %c0_13] : memref<256x256xbf16, #tpu.memory_space<vmem>>, vector<256x256xbf16>
      tpu.vector_store %arg5[%c0_12, %c0_13], %13 {strides = array<i32>} : memref<256x256xbf16, #tpu.memory_space<vmem>>, vector<256x256xbf16>,
    } else {
    }
    return
  }
  func.func @transform_0(%arg0: i32, %arg1: i32, %arg2: i32) -> (i32, i32) {
    %c0_i32 = arith.constant 0 : i32
    return %arg0, %arg2 : i32, i32
  }
  func.func @transform_1(%arg0: i32, %arg1: i32, %arg2: i32) -> (i32, i32) {
    %c0_i32 = arith.constant 0 : i32
    return %arg2, %arg1 : i32, i32
  }
  func.func @transform_2(%arg0: i32, %arg1: i32, %arg2: i32) -> (i32, i32) {
    %c0_i32 = arith.constant 0 : i32
    return %arg0, %arg1 : i32, i32
  }
}

module attributes {stable_mosaic.version = 11 : i64} {
  func.func @_matmul_resident_b_kernel(%arg0: i32, %arg1: i32, %arg2: memref<256x256xbf16, #tpu.memory_space<vmem>>, %arg3: memref<256x256xbf16, #tpu.memory_space<vmem>>, %arg4: memref<1x256xf32, #tpu.memory_space<vmem>>, %arg5: memref<256x256xf32, #tpu.memory_space<vmem>>, %arg6: memref<256x256xf32, #tpu.memory_space<vmem>>) attributes {dimension_semantics = [#tpu.dimension_semantics<parallel>, #tpu.dimension_semantics<arbitrary>], iteration_bounds = array<i64: 1, 1>, scalar_prefetch = 0 : i64, scratch_operands = 1 : i64, tpu.core_type = #tpu.core_type<tc>, window_params = [{transform_indices = @transform_0, window_bounds = array<i64: 256, 256>}, {pipeline_mode = #tpu.pipeline_mode<synchronous>, transform_indices = @transform_1, window_bounds = array<i64: 256, 256>}, {pipeline_mode = #tpu.pipeline_mode<synchronous>, transform_indices = @transform_2, window_bounds = array<i64: 1, 256>}, {transform_indices = @transform_3, window_bounds = array<i64: 256, 256>}]} {
    %c0_i32 = arith.constant 0 : i32
    %0 = arith.cmpi eq, %arg1, %c0_i32 : i32
    %1 = arith.extui %0 : i1 to i32
    %c0_i32_0 = arith.constant 0 : i32
    %2 = arith.cmpi ne, %1, %c0_i32_0 : i32
    scf.if %2 {
      %cst_9 = arith.constant 0.000000e+00 : f32
      %15 = vector.broadcast %cst_9 : f32 to vector<256x256xf32>
      %c0_10 = arith.constant 0 : index
      %c0_11 = arith.constant 0 : index
      %16 = vector.load %arg6[%c0_10, %c0_11] : memref<256x256xf32, #tpu.memory_space<vmem>>, vector<256x256xf32>
      tpu.vector_store %arg6[%c0_10, %c0_11], %15 {strides = array<i32>} : memref<256x256xf32, #tpu.memory_space<vmem>>, vector<256x256xf32>,
    } else {
    }
    %c256_i32 = arith.constant 256 : i32
    %3 = arith.muli %arg1, %c256_i32 : i32
    %4 = tpu.assume_multiple %3, 256 : i32
    %c0 = arith.constant 0 : index
    %c0_1 = arith.constant 0 : index
    %5 = vector.load %arg6[%c0, %c0_1] : memref<256x256xf32, #tpu.memory_space<vmem>>, vector<256x256xf32>
    %c0_2 = arith.constant 0 : index
    %c0_3 = arith.constant 0 : index
    %6 = vector.load %arg2[%c0_2, %c0_3] : memref<256x256xbf16, #tpu.memory_space<vmem>>, vector<256x256xbf16>
    %7 = arith.index_cast %4 : i32 to index
    %c0_4 = arith.constant 0 : index
    %8 = vector.load %arg3[%7, %c0_4] : memref<256x256xbf16, #tpu.memory_space<vmem>>, vector<256x256xbf16>
    %cst = arith.constant dense<0.000000e+00> : vector<256x256xf32>
    %9 = tpu.matmul %6, %8, %cst {dimension_numbers = #tpu.dot_dimension_numbers<[1], [0], [0], [1], [0, 0, 1, 1], [], []>} : vector<256x256xbf16>, vector<256x256xbf16>, vector<256x256xf32> -> vector<256x256xf32>
    %10 = arith.addf %5, %9 : vector<256x256xf32>
    %c0_5 = arith.constant 0 : index
    %c0_6 = arith.constant 0 : index
    %11 = vector.load %arg6[%c0_5, %c0_6] : memref<256x256xf32, #tpu.memory_space<vmem>>, vector<256x256xf32>
    tpu.vector_store %arg6[%c0_5, %c0_6], %10 {strides = array<i32>} : memref<256x256xf32, #tpu.memory_space<vmem>>, vector<256x256xf32>,
    %c0_i32_7 = arith.constant 0 : i32
    %12 = arith.cmpi eq, %arg1, %c0_i32_7 : i32
    %13 = arith.extui %12 : i1 to i32
    %c0_i32_8 = arith.constant 0 : i32
    %14 = arith.cmpi ne, %13, %c0_i32_8 : i32
    scf.if %14 {
      %c0_9 = arith.constant 0 : index
      %c0_10 = arith.constant 0 : index
      %15 = vector.load %arg6[%c0_9, %c0_10] : memref<256x256xf32, #tpu.memory_space<vmem>>, vector<256x256xf32>
      %c0_11 = arith.constant 0 : index
      %c0_12 = arith.constant 0 : index
      %16 = vector.load %arg4[%c0_11, %c0_12] : memref<1x256xf32, #tpu.memory_space<vmem>>, vector<1x256xf32>
      %17 = vector.broadcast %16 : vector<1x256xf32> to vector<256x256xf32>
      %18 = arith.addf %15, %17 : vector<256x256xf32>
      %c0_13 = arith.constant 0 : index
      %c0_14 = arith.constant 0 : index
      %19 = vector.load %arg5[%c0_13, %c0_14] : memref<256x256xf32, #tpu.memory_space<vmem>>, vector<256x256xf32>
      tpu.vector_store %arg5[%c0_13, %c0_14], %18 {strides = array<i32>} : memref<256x256xf32, #tpu.memory_space<vmem>>, vector<256x256xf32>,
    } else {
    }
    return
  }
  func.func @transform_0(%arg0: i32, %arg1: i32) -> (i32, i32) {
    %c0_i32 = arith.constant 0 : i32
    return %arg0, %arg1 : i32, i32
  }
  func.func @transform_1(%arg0: i32, %arg1: i32) -> (i32, i32) {
    %c0_i32 = arith.constant 0 : i32
    %c0_i32_0 = arith.constant 0 : i32
    %c0_i32_1 = arith.constant 0 : i32
    return %c0_i32, %c0_i32_0 : i32, i32
  }
  func.func @transform_2(%arg0: i32, %arg1: i32) -> (i32, i32) {
    %c0_i32 = arith.constant 0 : i32
    %c0_i32_0 = arith.constant 0 : i32
    %c0_i32_1 = arith.constant 0 : i32
    return %c0_i32, %c0_i32_0 : i32, i32
  }
  func.func @transform_3(%arg0: i32, %arg1: i32) -> (i32, i32) {
    %c0_i32 = arith.constant 0 : i32
    %c0_i32_0 = arith.constant 0 : i32
    return %arg0, %c0_i32 : i32, i32
  }
}

</mosaic_0001>

<llo_original>
// kernel: graph_convolution.2
$region0: #{graph_convolution.2}
  #allocation0 [shape = 'u32[]', space=smem, size = 0x4, offset = 0x4, fixed_abs, tag = 'smem constant byte address 0x4 - core index']
  #allocation1 [shape = 'u32[144,128]{1,0:T(1,128)}', space=vmem, size = 0x12000, scoped, tag = 'internal scratch']
  #allocation2 [shape = 'f32[256,256]{1,0:T(8,128)}', space=vmem, size = 0x40000, scoped, tag = 'scratch operand']
  %s0 = inlined_call_operand.vmem [shape: bf16[256,256], index: 0, kind: input, shape index: {}]
  %s1 = inlined_call_operand.vmem [shape: bf16[256,256], index: 1, kind: input, shape index: {}]
  %s2 = inlined_call_operand.vmem [shape: bf16[256,256], index: 2, kind: output, shape index: {}]
  %s3 = sld [smem:[#allocation0]]
  $region26: #{graph_convolution.2} parent=0
    _
  %s5 = ssub.s32 1, %s3
  %s6 = scalar_select 0, %s5, %s3
  // Predicated region
  $region2: #{graph_convolution.2} parent=0 // pred_check
    _
  $region3: #{graph_convolution.2} parent=0 // pred_check_branch
    %8 = sbr.rel (0) target = $region5
  $region4: #{graph_convolution.2} parent=0 // pred_region
    _
  $region5: #{graph_convolution.2} parent=0 // pred_fallthru
    _
  // Predicated region
  $region6: #{graph_convolution.2} parent=0 // pred_check
    _
  $region7: #{graph_convolution.2} parent=0 // pred_check_branch
    %10 = sbr.rel (0) target = $region9
  $region8: #{graph_convolution.2} parent=0 // pred_region
    _
  $region9: #{graph_convolution.2} parent=0 // pred_fallthru
    _
  %p11 = scmp.eq.s32.totalorder 0, 0
  // Predicated region
  $region10: #{graph_convolution.2} parent=0 // pred_check
    %p12 = pneg %p11
  $region11: #{graph_convolution.2} parent=0 // pred_check_branch
    %14 = sbr.rel (%p12) target = $region13
  $region12: #{graph_convolution.2} parent=0 // pred_region
    %15 = vst [vmem:[#allocation2] sm:$0xff] 0.0
    %16 = vst [vmem:[#allocation2 + $0x8] sm:$0xff] 0.0
    %17 = vst [vmem:[#allocation2 + $0x10] sm:$0xff] 0.0
    %18 = vst [vmem:[#allocation2 + $0x18] sm:$0xff] 0.0
    %19 = vst [vmem:[#allocation2 + $0x20] sm:$0xff] 0.0
    %20 = vst [vmem:[#allocation2 + $0x28] sm:$0xff] 0.0
    %21 = vst [vmem:[#allocation2 + $0x30] sm:$0xff] 0.0
    %22 = vst [vmem:[#allocation2 + $0x38] sm:$0xff] 0.0
    %23 = vst [vmem:[#allocation2 + $0x40] sm:$0xff] 0.0
    %24 = vst [vmem:[#allocation2 + $0x48] sm:$0xff] 0.0
    %25 = vst [vmem:[#allocation2 + $0x50] sm:$0xff] 0.0
    %26 = vst [vmem:[#allocation2 + $0x58] sm:$0xff] 0.0
    %27 = vst [vmem:[#allocation2 + $0x60] sm:$0xff] 0.0
    %28 = vst [vmem:[#allocation2 + $0x68] sm:$0xff] 0.0
    %29 = vst [vmem:[#allocation2 + $0x70] sm:$0xff] 0.0
    %30 = vst [vmem:[#allocation2 + $0x78] sm:$0xff] 0.0
    %31 = vst [vmem:[#allocation2 + $0x80] sm:$0xff] 0.0
    %32 = vst [vmem:[#allocation2 + $0x88] sm:$0xff] 0.0
    %33 = vst [vmem:[#allocation2 + $0x90] sm:$0xff] 0.0
    %34 = vst [vmem:[#allocation2 + $0x98] sm:$0xff] 0.0
    %35 = vst [vmem:[#allocation2 + $0xa0] sm:$0xff] 0.0
    %36 = vst [vmem:[#allocation2 + $0xa8] sm:$0xff] 0.0
    %37 = vst [vmem:[#allocation2 + $0xb0] sm:$0xff] 0.0
    %38 = vst [vmem:[#allocation2 + $0xb8] sm:$0xff] 0.0
    %39 = vst [vmem:[#allocation2 + $0xc0] sm:$0xff] 0.0
    %40 = vst [vmem:[#allocation2 + $0xc8] sm:$0xff] 0.0
    %41 = vst [vmem:[#allocation2 + $0xd0] sm:$0xff] 0.0
    %42 = vst [vmem:[#allocation2 + $0xd8] sm:$0xff] 0.0
    %43 = vst [vmem:[#allocation2 + $0xe0] sm:$0xff] 0.0
    %44 = vst [vmem:[#allocation2 + $0xe8] sm:$0xff] 0.0
    %45 = vst [vmem:[#allocation2 + $0xf0] sm:$0xff] 0.0
    %46 = vst [vmem:[#allocation2 + $0xf8] sm:$0xff] 0.0
    %47 = vst [vmem:[#allocation2 + $0x100] sm:$0xff] 0.0
    %48 = vst [vmem:[#allocation2 + $0x108] sm:$0xff] 0.0
    %49 = vst [vmem:[#allocation2 + $0x110] sm:$0xff] 0.0
    %50 = vst [vmem:[#allocation2 + $0x118] sm:$0xff] 0.0
    %51 = vst [vmem:[#allocation2 + $0x120] sm:$0xff] 0.0
    %52 = vst [vmem:[#allocation2 + $0x128] sm:$0xff] 0.0
    %53 = vst [vmem:[#allocation2 + $0x130] sm:$0xff] 0.0
    %54 = vst [vmem:[#allocation2 + $0x138] sm:$0xff] 0.0
    %55 = vst [vmem:[#allocation2 + $0x140] sm:$0xff] 0.0
    %56 = vst [vmem:[#allocation2 + $0x148] sm:$0xff] 0.0
    %57 = vst [vmem:[#allocation2 + $0x150] sm:$0xff] 0.0
    %58 = vst [vmem:[#allocation2 + $0x158] sm:$0xff] 0.0
    %59 = vst [vmem:[#allocation2 + $0x160] sm:$0xff] 0.0
    %60 = vst [vmem:[#allocation2 + $0x168] sm:$0xff] 0.0
    %61 = vst [vmem:[#allocation2 + $0x170] sm:$0xff] 0.0
    %62 = vst [vmem:[#allocation2 + $0x178] sm:$0xff] 0.0
    %63 = vst [vmem:[#allocation2 + $0x180] sm:$0xff] 0.0
    %64 = vst [vmem:[#allocation2 + $0x188] sm:$0xff] 0.0
    %65 = vst [vmem:[#allocation2 + $0x190] sm:$0xff] 0.0
    %66 = vst [vmem:[#allocation2 + $0x198] sm:$0xff] 0.0
    %67 = vst [vmem:[#allocation2 + $0x1a0] sm:$0xff] 0.0
    %68 = vst [vmem:[#allocation2 + $0x1a8] sm:$0xff] 0.0
    %69 = vst [vmem:[#allocation2 + $0x1b0] sm:$0xff] 0.0
    %70 = vst [vmem:[#allocation2 + $0x1b8] sm:$0xff] 0.0
    %71 = vst [vmem:[#allocation2 + $0x1c0] sm:$0xff] 0.0
    %72 = vst [vmem:[#allocation2 + $0x1c8] sm:$0xff] 0.0
    %73 = vst [vmem:[#allocation2 + $0x1d0] sm:$0xff] 0.0
    %74 = vst [vmem:[#allocation2 + $0x1d8] sm:$0xff] 0.0
    %75 = vst [vmem:[#allocation2 + $0x1e0] sm:$0xff] 0.0
    %76 = vst [vmem:[#allocation2 + $0x1e8] sm:$0xff] 0.0
    %77 = vst [vmem:[#allocation2 + $0x1f0] sm:$0xff] 0.0
    %78 = vst [vmem:[#allocation2 + $0x1f8] sm:$0xff] 0.0
  $region13: #{graph_convolution.2} parent=0 // pred_fallthru
    _
  %v79 = vld [vmem:[#allocation2] sm:$0xff]
  %v80 = vld [vmem:[#allocation2 + $0x8] sm:$0xff]
  %v81 = vld [vmem:[#allocation2 + $0x10] sm:$0xff]
  %v82 = vld [vmem:[#allocation2 + $0x18] sm:$0xff]
  %v83 = vld [vmem:[#allocation2 + $0x20] sm:$0xff]
  %v84 = vld [vmem:[#allocation2 + $0x28] sm:$0xff]
  %v85 = vld [vmem:[#allocation2 + $0x30] sm:$0xff]
  %v86 = vld [vmem:[#allocation2 + $0x38] sm:$0xff]
  %v87 = vld [vmem:[#allocation2 + $0x40] sm:$0xff]
  %v88 = vld [vmem:[#allocation2 + $0x48] sm:$0xff]
  %v89 = vld [vmem:[#allocation2 + $0x50] sm:$0xff]
  %v90 = vld [vmem:[#allocation2 + $0x58] sm:$0xff]
  %v91 = vld [vmem:[#allocation2 + $0x60] sm:$0xff]
  %v92 = vld [vmem:[#allocation2 + $0x68] sm:$0xff]
  %v93 = vld [vmem:[#allocation2 + $0x70] sm:$0xff]
  %v94 = vld [vmem:[#allocation2 + $0x78] sm:$0xff]
  %v95 = vld [vmem:[#allocation2 + $0x80] sm:$0xff]
  %v96 = vld [vmem:[#allocation2 + $0x88] sm:$0xff]
  %v97 = vld [vmem:[#allocation2 + $0x90] sm:$0xff]
  %v98 = vld [vmem:[#allocation2 + $0x98] sm:$0xff]
  %v99 = vld [vmem:[#allocation2 + $0xa0] sm:$0xff]
  %v100 = vld [vmem:[#allocation2 + $0xa8] sm:$0xff]
  %v101 = vld [vmem:[#allocation2 + $0xb0] sm:$0xff]
  %v102 = vld [vmem:[#allocation2 + $0xb8] sm:$0xff]
  %v103 = vld [vmem:[#allocation2 + $0xc0] sm:$0xff]
  %v104 = vld [vmem:[#allocation2 + $0xc8] sm:$0xff]
  %v105 = vld [vmem:[#allocation2 + $0xd0] sm:$0xff]
  %v106 = vld [vmem:[#allocation2 + $0xd8] sm:$0xff]
  %v107 = vld [vmem:[#allocation2 + $0xe0] sm:$0xff]
  %v108 = vld [vmem:[#allocation2 + $0xe8] sm:$0xff]
  %v109 = vld [vmem:[#allocation2 + $0xf0] sm:$0xff]
  %v110 = vld [vmem:[#allocation2 + $0xf8] sm:$0xff]
  %v111 = vld [vmem:[#allocation2 + $0x100] sm:$0xff]
  %v112 = vld [vmem:[#allocation2 + $0x108] sm:$0xff]
  %v113 = vld [vmem:[#allocation2 + $0x110] sm:$0xff]
  %v114 = vld [vmem:[#allocation2 + $0x118] sm:$0xff]
  %v115 = vld [vmem:[#allocation2 + $0x120] sm:$0xff]
  %v116 = vld [vmem:[#allocation2 + $0x128] sm:$0xff]
  %v117 = vld [vmem:[#allocation2 + $0x130] sm:$0xff]
  %v118 = vld [vmem:[#allocation2 + $0x138] sm:$0xff]
  %v119 = vld [vmem:[#allocation2 + $0x140] sm:$0xff]
  %v120 = vld [vmem:[#allocation2 + $0x148] sm:$0xff]
  %v121 = vld [vmem:[#allocation2 + $0x150] sm:$0xff]
  %v122 = vld [vmem:[#allocation2 + $0x158] sm:$0xff]
  %v123 = vld [vmem:[#allocation2 + $0x160] sm:$0xff]
  %v124 = vld [vmem:[#allocation2 + $0x168] sm:$0xff]
  %v125 = vld [vmem:[#allocation2 + $0x170] sm:$0xff]
  %v126 = vld [vmem:[#allocation2 + $0x178] sm:$0xff]
  %v127 = vld [vmem:[#allocation2 + $0x180] sm:$0xff]
  %v128 = vld [vmem:[#allocation2 + $0x188] sm:$0xff]
  %v129 = vld [vmem:[#allocation2 + $0x190] sm:$0xff]
  %v130 = vld [vmem:[#allocation2 + $0x198] sm:$0xff]
  %v131 = vld [vmem:[#allocation2 + $0x1a0] sm:$0xff]
  %v132 = vld [vmem:[#allocation2 + $0x1a8] sm:$0xff]
  %v133 = vld [vmem:[#allocation2 + $0x1b0] sm:$0xff]
  %v134 = vld [vmem:[#allocation2 + $0x1b8] sm:$0xff]
  %v135 = vld [vmem:[#allocation2 + $0x1c0] sm:$0xff]
  %v136 = vld [vmem:[#allocation2 + $0x1c8] sm:$0xff]
  %v137 = vld [vmem:[#allocation2 + $0x1d0] sm:$0xff]
  %v138 = vld [vmem:[#allocation2 + $0x1d8] sm:$0xff]
  %v139 = vld [vmem:[#allocation2 + $0x1e0] sm:$0xff]
  %v140 = vld [vmem:[#allocation2 + $0x1e8] sm:$0xff]
  %v141 = vld [vmem:[#allocation2 + $0x1f0] sm:$0xff]
  %v142 = vld [vmem:[#allocation2 + $0x1f8] sm:$0xff]
  %v143 = vld [vmem:[%s0] sm:$0xff]
  %v144 = vld [vmem:[%s0 + $0x8] sm:$0xff]
  %v145 = vld [vmem:[%s0 + $0x10] sm:$0xff]
  %v146 = vld [vmem:[%s0 + $0x18] sm:$0xff]
  %v147 = vld [vmem:[%s0 + $0x20] sm:$0xff]
  %v148 = vld [vmem:[%s0 + $0x28] sm:$0xff]
  %v149 = vld [vmem:[%s0 + $0x30] sm:$0xff]
  %v150 = vld [vmem:[%s0 + $0x38] sm:$0xff]
  %v151 = vld [vmem:[%s0 + $0x40] sm:$0xff]
  %v152 = vld [vmem:[%s0 + $0x48] sm:$0xff]
  %v153 = vld [vmem:[%s0 + $0x50] sm:$0xff]
  %v154 = vld [vmem:[%s0 + $0x58] sm:$0xff]
  %v155 = vld [vmem:[%s0 + $0x60] sm:$0xff]
  %v156 = vld [vmem:[%s0 + $0x68] sm:$0xff]
  %v157 = vld [vmem:[%s0 + $0x70] sm:$0xff]
  %v158 = vld [vmem:[%s0 + $0x78] sm:$0xff]
  %v159 = vld [vmem:[%s0 + $0x80] sm:$0xff]
  %v160 = vld [vmem:[%s0 + $0x88] sm:$0xff]
  %v161 = vld [vmem:[%s0 + $0x90] sm:$0xff]
  %v162 = vld [vmem:[%s0 + $0x98] sm:$0xff]
  %v163 = vld [vmem:[%s0 + $0xa0] sm:$0xff]
  %v164 = vld [vmem:[%s0 + $0xa8] sm:$0xff]
  %v165 = vld [vmem:[%s0 + $0xb0] sm:$0xff]
  %v166 = vld [vmem:[%s0 + $0xb8] sm:$0xff]
  %v167 = vld [vmem:[%s0 + $0xc0] sm:$0xff]
  %v168 = vld [vmem:[%s0 + $0xc8] sm:$0xff]
  %v169 = vld [vmem:[%s0 + $0xd0] sm:$0xff]
  %v170 = vld [vmem:[%s0 + $0xd8] sm:$0xff]
  %v171 = vld [vmem:[%s0 + $0xe0] sm:$0xff]
  %v172 = vld [vmem:[%s0 + $0xe8] sm:$0xff]
  %v173 = vld [vmem:[%s0 + $0xf0] sm:$0xff]
  %v174 = vld [vmem:[%s0 + $0xf8] sm:$0xff]
  %v175 = vld [vmem:[%s1] sm:$0xff]
  %v176 = vld [vmem:[%s1 + $0x8] sm:$0xff]
  %v177 = vld [vmem:[%s1 + $0x10] sm:$0xff]
  %v178 = vld [vmem:[%s1 + $0x18] sm:$0xff]
  %v179 = vld [vmem:[%s1 + $0x20] sm:$0xff]
  %v180 = vld [vmem:[%s1 + $0x28] sm:$0xff]
  %v181 = vld [vmem:[%s1 + $0x30] sm:$0xff]
  %v182 = vld [vmem:[%s1 + $0x38] sm:$0xff]
  %v183 = vld [vmem:[%s1 + $0x40] sm:$0xff]
  %v184 = vld [vmem:[%s1 + $0x48] sm:$0xff]
  %v185 = vld [vmem:[%s1 + $0x50] sm:$0xff]
  %v186 = vld [vmem:[%s1 + $0x58] sm:$0xff]
  %v187 = vld [vmem:[%s1 + $0x60] sm:$0xff]
  %v188 = vld [vmem:[%s1 + $0x68] sm:$0xff]
  %v189 = vld [vmem:[%s1 + $0x70] sm:$0xff]
  %v190 = vld [vmem:[%s1 + $0x78] sm:$0xff]
  %v191 = vld [vmem:[%s1 + $0x80] sm:$0xff]
  %v192 = vld [vmem:[%s1 + $0x88] sm:$0xff]
  %v193 = vld [vmem:[%s1 + $0x90] sm:$0xff]
  %v194 = vld [vmem:[%s1 + $0x98] sm:$0xff]
  %v195 = vld [vmem:[%s1 + $0xa0] sm:$0xff]
  %v196 = vld [vmem:[%s1 + $0xa8] sm:$0xff]
  %v197 = vld [vmem:[%s1 + $0xb0] sm:$0xff]
  %v198 = vld [vmem:[%s1 + $0xb8] sm:$0xff]
  %v199 = vld [vmem:[%s1 + $0xc0] sm:$0xff]
  %v200 = vld [vmem:[%s1 + $0xc8] sm:$0xff]
  %v201 = vld [vmem:[%s1 + $0xd0] sm:$0xff]
  %v202 = vld [vmem:[%s1 + $0xd8] sm:$0xff]
  %v203 = vld [vmem:[%s1 + $0xe0] sm:$0xff]
  %v204 = vld [vmem:[%s1 + $0xe8] sm:$0xff]
  %v205 = vld [vmem:[%s1 + $0xf0] sm:$0xff]
  %v206 = vld [vmem:[%s1 + $0xf8] sm:$0xff]
  %v239 = vunpack.c.l.b16 %v143
  %v240 = vunpack.c.h.b16 %v143
  %v241 = vunpack.c.l.b16 %v144
  %v242 = vunpack.c.h.b16 %v144
  %v243 = vunpack.c.l.b16 %v145
  %v244 = vunpack.c.h.b16 %v145
  %v245 = vunpack.c.l.b16 %v146
  %v246 = vunpack.c.h.b16 %v146
  %v247 = vunpack.c.l.b16 %v147
  %v248 = vunpack.c.h.b16 %v147
  %v249 = vunpack.c.l.b16 %v148
  %v250 = vunpack.c.h.b16 %v148
  %v251 = vunpack.c.l.b16 %v149
  %v252 = vunpack.c.h.b16 %v149
  %v253 = vunpack.c.l.b16 %v150
  %v254 = vunpack.c.h.b16 %v150
  %v255 = vunpack.c.l.b16 %v151
  %v256 = vunpack.c.h.b16 %v151
  %v257 = vunpack.c.l.b16 %v152
  %v258 = vunpack.c.h.b16 %v152
  %v259 = vunpack.c.l.b16 %v153
  %v260 = vunpack.c.h.b16 %v153
  %v261 = vunpack.c.l.b16 %v154
  %v262 = vunpack.c.h.b16 %v154
  %v263 = vunpack.c.l.b16 %v155
  %v264 = vunpack.c.h.b16 %v155
  %v265 = vunpack.c.l.b16 %v156
  %v266 = vunpack.c.h.b16 %v156
  %v267 = vunpack.c.l.b16 %v157
  %v268 = vunpack.c.h.b16 %v157
  %v269 = vunpack.c.l.b16 %v158
  %v270 = vunpack.c.h.b16 %v158
  %v271 = vunpack.c.l.b16 %v159
  %v272 = vunpack.c.h.b16 %v159
  %v273 = vunpack.c.l.b16 %v160
  %v274 = vunpack.c.h.b16 %v160
  %v275 = vunpack.c.l.b16 %v161
  %v276 = vunpack.c.h.b16 %v161
  %v277 = vunpack.c.l.b16 %v162
  %v278 = vunpack.c.h.b16 %v162
  %v279 = vunpack.c.l.b16 %v163
  %v280 = vunpack.c.h.b16 %v163
  %v281 = vunpack.c.l.b16 %v164
  %v282 = vunpack.c.h.b16 %v164
  %v283 = vunpack.c.l.b16 %v165
  %v284 = vunpack.c.h.b16 %v165
  %v285 = vunpack.c.l.b16 %v166
  %v286 = vunpack.c.h.b16 %v166
  %v287 = vunpack.c.l.b16 %v167
  %v288 = vunpack.c.h.b16 %v167
  %v289 = vunpack.c.l.b16 %v168
  %v290 = vunpack.c.h.b16 %v168
  %v291 = vunpack.c.l.b16 %v169
  %v292 = vunpack.c.h.b16 %v169
  %v293 = vunpack.c.l.b16 %v170
  %v294 = vunpack.c.h.b16 %v170
  %v295 = vunpack.c.l.b16 %v171
  %v296 = vunpack.c.h.b16 %v171
  %v297 = vunpack.c.l.b16 %v172
  %v298 = vunpack.c.h.b16 %v172
  %v299 = vunpack.c.l.b16 %v173
  %v300 = vunpack.c.h.b16 %v173
  %v301 = vunpack.c.l.b16 %v174
  %v302 = vunpack.c.h.b16 %v174
  %v303 = vpack.c.b16 %v241, %v239
  %v304 = vpack.c.b16 %v242, %v240
  %v305 = vpack.c.b16 %v245, %v243
  %v306 = vpack.c.b16 %v246, %v244
  %v307 = vpack.c.b16 %v249, %v247
  %v308 = vpack.c.b16 %v250, %v248
  %v309 = vpack.c.b16 %v253, %v251
  %v310 = vpack.c.b16 %v254, %v252
  %v311 = vpack.c.b16 %v257, %v255
  %v312 = vpack.c.b16 %v258, %v256
  %v313 = vpack.c.b16 %v261, %v259
  %v314 = vpack.c.b16 %v262, %v260
  %v315 = vpack.c.b16 %v265, %v263
  %v316 = vpack.c.b16 %v266, %v264
  %v317 = vpack.c.b16 %v269, %v267
  %v318 = vpack.c.b16 %v270, %v268
  %v319 = vpack.c.b16 %v273, %v271
  %v320 = vpack.c.b16 %v274, %v272
  %v321 = vpack.c.b16 %v277, %v275
  %v322 = vpack.c.b16 %v278, %v276
  %v323 = vpack.c.b16 %v281, %v279
  %v324 = vpack.c.b16 %v282, %v280
  %v325 = vpack.c.b16 %v285, %v283
  %v326 = vpack.c.b16 %v286, %v284
  %v327 = vpack.c.b16 %v289, %v287
  %v328 = vpack.c.b16 %v290, %v288
  %v329 = vpack.c.b16 %v293, %v291
  %v330 = vpack.c.b16 %v294, %v292
  %v331 = vpack.c.b16 %v297, %v295
  %v332 = vpack.c.b16 %v298, %v296
  %v333 = vpack.c.b16 %v301, %v299
  %v334 = vpack.c.b16 %v302, %v300
  %v399 = vunpack.c.l.b16 %v175
  %v400 = vunpack.c.h.b16 %v175
  %v401 = vunpack.c.l.b16 %v176
  %v402 = vunpack.c.h.b16 %v176
  %v403 = vunpack.c.l.b16 %v177
  %v404 = vunpack.c.h.b16 %v177
  %v405 = vunpack.c.l.b16 %v178
  %v406 = vunpack.c.h.b16 %v178
  %v407 = vunpack.c.l.b16 %v179
  %v408 = vunpack.c.h.b16 %v179
  %v409 = vunpack.c.l.b16 %v180
  %v410 = vunpack.c.h.b16 %v180
  %v411 = vunpack.c.l.b16 %v181
  %v412 = vunpack.c.h.b16 %v181
  %v413 = vunpack.c.l.b16 %v182
  %v414 = vunpack.c.h.b16 %v182
  %v415 = vunpack.c.l.b16 %v183
  %v416 = vunpack.c.h.b16 %v183
  %v417 = vunpack.c.l.b16 %v184
  %v418 = vunpack.c.h.b16 %v184
  %v419 = vunpack.c.l.b16 %v185
  %v420 = vunpack.c.h.b16 %v185
  %v421 = vunpack.c.l.b16 %v186
  %v422 = vunpack.c.h.b16 %v186
  %v423 = vunpack.c.l.b16 %v187
  %v424 = vunpack.c.h.b16 %v187
  %v425 = vunpack.c.l.b16 %v188
  %v426 = vunpack.c.h.b16 %v188
  %v427 = vunpack.c.l.b16 %v189
  %v428 = vunpack.c.h.b16 %v189
  %v429 = vunpack.c.l.b16 %v190
  %v430 = vunpack.c.h.b16 %v190
  %v431 = vunpack.c.l.b16 %v191
  %v432 = vunpack.c.h.b16 %v191
  %v433 = vunpack.c.l.b16 %v192
  %v434 = vunpack.c.h.b16 %v192
  %v435 = vunpack.c.l.b16 %v193
  %v436 = vunpack.c.h.b16 %v193
  %v437 = vunpack.c.l.b16 %v194
  %v438 = vunpack.c.h.b16 %v194
  %v439 = vunpack.c.l.b16 %v195
  %v440 = vunpack.c.h.b16 %v195
  %v441 = vunpack.c.l.b16 %v196
  %v442 = vunpack.c.h.b16 %v196
  %v443 = vunpack.c.l.b16 %v197
  %v444 = vunpack.c.h.b16 %v197
  %v445 = vunpack.c.l.b16 %v198
  %v446 = vunpack.c.h.b16 %v198
  %v447 = vunpack.c.l.b16 %v199
  %v448 = vunpack.c.h.b16 %v199
  %v449 = vunpack.c.l.b16 %v200
  %v450 = vunpack.c.h.b16 %v200
  %v451 = vunpack.c.l.b16 %v201
  %v452 = vunpack.c.h.b16 %v201
  %v453 = vunpack.c.l.b16 %v202
  %v454 = vunpack.c.h.b16 %v202
  %v455 = vunpack.c.l.b16 %v203
  %v456 = vunpack.c.h.b16 %v203
  %v457 = vunpack.c.l.b16 %v204
  %v458 = vunpack.c.h.b16 %v204
  %v459 = vunpack.c.l.b16 %v205
  %v460 = vunpack.c.h.b16 %v205
  %v461 = vunpack.c.l.b16 %v206
  %v462 = vunpack.c.h.b16 %v206
  %v463 = vpack.c.b16 %v401, %v399
  %v464 = vpack.c.b16 %v402, %v400
  %v465 = vpack.c.b16 %v405, %v403
  %v466 = vpack.c.b16 %v406, %v404
  %v467 = vpack.c.b16 %v409, %v407
  %v468 = vpack.c.b16 %v410, %v408
  %v469 = vpack.c.b16 %v413, %v411
  %v470 = vpack.c.b16 %v414, %v412
  %v471 = vpack.c.b16 %v417, %v415
  %v472 = vpack.c.b16 %v418, %v416
  %v473 = vpack.c.b16 %v421, %v419
  %v474 = vpack.c.b16 %v422, %v420
  %v475 = vpack.c.b16 %v425, %v423
  %v476 = vpack.c.b16 %v426, %v424
  %v477 = vpack.c.b16 %v429, %v427
  %v478 = vpack.c.b16 %v430, %v428
  %v479 = vpack.c.b16 %v433, %v431
  %v480 = vpack.c.b16 %v434, %v432
  %v481 = vpack.c.b16 %v437, %v435
  %v482 = vpack.c.b16 %v438, %v436
  %v483 = vpack.c.b16 %v441, %v439
  %v484 = vpack.c.b16 %v442, %v440
  %v485 = vpack.c.b16 %v445, %v443
  %v486 = vpack.c.b16 %v446, %v444
  %v487 = vpack.c.b16 %v449, %v447
  %v488 = vpack.c.b16 %v450, %v448
  %v489 = vpack.c.b16 %v453, %v451
  %v490 = vpack.c.b16 %v454, %v452
  %v491 = vpack.c.b16 %v457, %v455
  %v492 = vpack.c.b16 %v458, %v456
  %v493 = vpack.c.b16 %v461, %v459
  %v494 = vpack.c.b16 %v462, %v460
  %527 = vmatprep.subr.bf16.mxu0 %v464
  %528 = vmatpush1.bf16.msra.mxu0 %v463
  %529 = vmatprep.subr.bf16.mxu0 %v466
  %530 = vmatpush1.bf16.msra.mxu0 %v465
  %531 = vmatprep.subr.bf16.mxu0 %v468
  %532 = vmatpush1.bf16.msra.mxu0 %v467
  %533 = vmatprep.subr.bf16.mxu0 %v470
  %534 = vmatpush1.bf16.msra.mxu0 %v469
  %535 = vmatprep.subr.bf16.mxu0 %v472
  %536 = vmatpush1.bf16.msra.mxu0 %v471
  %537 = vmatprep.subr.bf16.mxu0 %v474
  %538 = vmatpush1.bf16.msra.mxu0 %v473
  %539 = vmatprep.subr.bf16.mxu0 %v476
  %540 = vmatpush1.bf16.msra.mxu0 %v475
  %541 = vmatprep.subr.bf16.mxu0 %v478
  %542 = vmatpush1.bf16.msra.mxu0 %v477
  %543 = vmatprep.subr.bf16.mxu0 %v480
  %544 = vmatpush1.bf16.msra.mxu0 %v479
  %545 = vmatprep.subr.bf16.mxu0 %v482
  %546 = vmatpush1.bf16.msra.mxu0 %v481
  %547 = vmatprep.subr.bf16.mxu0 %v484
  %548 = vmatpush1.bf16.msra.mxu0 %v483
  %549 = vmatprep.subr.bf16.mxu0 %v486
  %550 = vmatpush1.bf16.msra.mxu0 %v485
  %551 = vmatprep.subr.bf16.mxu0 %v488
  %552 = vmatpush1.bf16.msra.mxu0 %v487
  %553 = vmatprep.subr.bf16.mxu0 %v490
  %554 = vmatpush1.bf16.msra.mxu0 %v489
  %555 = vmatprep.subr.bf16.mxu0 %v492
  %556 = vmatpush1.bf16.msra.mxu0 %v491
  %557 = vmatprep.subr.bf16.mxu0 %v494
  %558 = vmatpush1.bf16.msra.mxu0 %v493
  %559 = vmatprep.mubr.bf16.mxu0 %v304
  %560 = vmatmul.mubr.bf16.gmra.mrb[0].mxu0 %v303
  %v561 = vpop.f32.mrb[0].mxu0
  %v562 = vadd.f32 0.0, %v561
  %v563 = vpop.f32.mrb[0].mxu0
  %v564 = vadd.f32 0.0, %v563
  %v565 = vpop.f32.mrb[0].mxu0
  %v566 = vadd.f32 0.0, %v565
  %v567 = vpop.f32.mrb[0].mxu0
  %v568 = vadd.f32 0.0, %v567
  %569 = vmatprep.mubr.bf16.mxu0 %v306
  %570 = vmatmul.mubr.bf16.gmra.mrb[0].mxu0 %v305
  %v571 = vpop.f32.mrb[0].mxu0
  %v572 = vadd.f32 0.0, %v571
  %v573 = vpop.f32.mrb[0].mxu0
  %v574 = vadd.f32 0.0, %v573
  %v575 = vpop.f32.mrb[0].mxu0
  %v576 = vadd.f32 0.0, %v575
  %v577 = vpop.f32.mrb[0].mxu0
  %v578 = vadd.f32 0.0, %v577
  %579 = vmatprep.mubr.bf16.mxu0 %v308
  %580 = vmatmul.mubr.bf16.gmra.mrb[0].mxu0 %v307
  %v581 = vpop.f32.mrb[0].mxu0
  %v582 = vadd.f32 0.0, %v581
  %v583 = vpop.f32.mrb[0].mxu0
  %v584 = vadd.f32 0.0, %v583
  %v585 = vpop.f32.mrb[0].mxu0
  %v586 = vadd.f32 0.0, %v585
  %v587 = vpop.f32.mrb[0].mxu0
  %v588 = vadd.f32 0.0, %v587
  %589 = vmatprep.mubr.bf16.mxu0 %v310
  %590 = vmatmul.mubr.bf16.gmra.mrb[0].mxu0 %v309
  %v591 = vpop.f32.mrb[0].mxu0
  %v592 = vadd.f32 0.0, %v591
  %v593 = vpop.f32.mrb[0].mxu0
  %v594 = vadd.f32 0.0, %v593
  %v595 = vpop.f32.mrb[0].mxu0
  %v596 = vadd.f32 0.0, %v595
  %v597 = vpop.f32.mrb[0].mxu0
  %v598 = vadd.f32 0.0, %v597
  %599 = vmatprep.mubr.bf16.mxu0 %v312
  %600 = vmatmul.mubr.bf16.gmra.mrb[0].mxu0 %v311
  %v601 = vpop.f32.mrb[0].mxu0
  %v602 = vadd.f32 0.0, %v601
  %v603 = vpop.f32.mrb[0].mxu0
  %v604 = vadd.f32 0.0, %v603
  %v605 = vpop.f32.mrb[0].mxu0
  %v606 = vadd.f32 0.0, %v605
  %v607 = vpop.f32.mrb[0].mxu0
  %v608 = vadd.f32 0.0, %v607
  %609 = vmatprep.mubr.bf16.mxu0 %v314
  %610 = vmatmul.mubr.bf16.gmra.mrb[0].mxu0 %v313
  %v611 = vpop.f32.mrb[0].mxu0
  %v612 = vadd.f32 0.0, %v611
  %v613 = vpop.f32.mrb[0].mxu0
  %v614 = vadd.f32 0.0, %v613
  %v615 = vpop.f32.mrb[0].mxu0
  %v616 = vadd.f32 0.0, %v615
  %v617 = vpop.f32.mrb[0].mxu0
  %v618 = vadd.f32 0.0, %v617
  %619 = vmatprep.mubr.bf16.mxu0 %v316
  %620 = vmatmul.mubr.bf16.gmra.mrb[0].mxu0 %v315
  %v621 = vpop.f32.mrb[0].mxu0
  %v622 = vadd.f32 0.0, %v621
  %v623 = vpop.f32.mrb[0].mxu0
  %v624 = vadd.f32 0.0, %v623
  %v625 = vpop.f32.mrb[0].mxu0
  %v626 = vadd.f32 0.0, %v625
  %v627 = vpop.f32.mrb[0].mxu0
  %v628 = vadd.f32 0.0, %v627
  %629 = vmatprep.mubr.bf16.mxu0 %v318
  %630 = vmatmul.mubr.bf16.gmra.mrb[0].mxu0 %v317
  %v631 = vpop.f32.mrb[0].mxu0
  %v632 = vadd.f32 0.0, %v631
  %v633 = vpop.f32.mrb[0].mxu0
  %v634 = vadd.f32 0.0, %v633
  %v635 = vpop.f32.mrb[0].mxu0
  %v636 = vadd.f32 0.0, %v635
  %v637 = vpop.f32.mrb[0].mxu0
  %v638 = vadd.f32 0.0, %v637
  %639 = vmatprep.mubr.bf16.mxu0 %v320
  %640 = vmatmul.mubr.bf16.gmra.mrb[0].mxu0 %v319
  %v641 = vpop.f32.mrb[0].mxu0
  %v642 = vadd.f32 0.0, %v641
  %v643 = vpop.f32.mrb[0].mxu0
  %v644 = vadd.f32 0.0, %v643
  %v645 = vpop.f32.mrb[0].mxu0
  %v646 = vadd.f32 0.0, %v645
  %v647 = vpop.f32.mrb[0].mxu0
  %v648 = vadd.f32 0.0, %v647
  %649 = vmatprep.mubr.bf16.mxu0 %v322
  %650 = vmatmul.mubr.bf16.gmra.mrb[0].mxu0 %v321
  %v651 = vpop.f32.mrb[0].mxu0
  %v652 = vadd.f32 0.0, %v651
  %v653 = vpop.f32.mrb[0].mxu0
  %v654 = vadd.f32 0.0, %v653
  %v655 = vpop.f32.mrb[0].mxu0
  %v656 = vadd.f32 0.0, %v655
  %v657 = vpop.f32.mrb[0].mxu0
  %v658 = vadd.f32 0.0, %v657
  %659 = vmatprep.mubr.bf16.mxu0 %v324
  %660 = vmatmul.mubr.bf16.gmra.mrb[0].mxu0 %v323
  %v661 = vpop.f32.mrb[0].mxu0
  %v662 = vadd.f32 0.0, %v661
  %v663 = vpop.f32.mrb[0].mxu0
  %v664 = vadd.f32 0.0, %v663
  %v665 = vpop.f32.mrb[0].mxu0
  %v666 = vadd.f32 0.0, %v665
  %v667 = vpop.f32.mrb[0].mxu0
  %v668 = vadd.f32 0.0, %v667
  %669 = vmatprep.mubr.bf16.mxu0 %v326
  %670 = vmatmul.mubr.bf16.gmra.mrb[0].mxu0 %v325
  %v671 = vpop.f32.mrb[0].mxu0
  %v672 = vadd.f32 0.0, %v671
  %v673 = vpop.f32.mrb[0].mxu0
  %v674 = vadd.f32 0.0, %v673
  %v675 = vpop.f32.mrb[0].mxu0
  %v676 = vadd.f32 0.0, %v675
  %v677 = vpop.f32.mrb[0].mxu0
  %v678 = vadd.f32 0.0, %v677
  %679 = vmatprep.mubr.bf16.mxu0 %v328
  %680 = vmatmul.mubr.bf16.gmra.mrb[0].mxu0 %v327
  %v681 = vpop.f32.mrb[0].mxu0
  %v682 = vadd.f32 0.0, %v681
  %v683 = vpop.f32.mrb[0].mxu0
  %v684 = vadd.f32 0.0, %v683
  %v685 = vpop.f32.mrb[0].mxu0
  %v686 = vadd.f32 0.0, %v685
  %v687 = vpop.f32.mrb[0].mxu0
  %v688 = vadd.f32 0.0, %v687
  %689 = vmatprep.mubr.bf16.mxu0 %v330
  %690 = vmatmul.mubr.bf16.gmra.mrb[0].mxu0 %v329
  %v691 = vpop.f32.mrb[0].mxu0
  %v692 = vadd.f32 0.0, %v691
  %v693 = vpop.f32.mrb[0].mxu0
  %v694 = vadd.f32 0.0, %v693
  %v695 = vpop.f32.mrb[0].mxu0
  %v696 = vadd.f32 0.0, %v695
  %v697 = vpop.f32.mrb[0].mxu0
  %v698 = vadd.f32 0.0, %v697
  %699 = vmatprep.mubr.bf16.mxu0 %v332
  %700 = vmatmul.mubr.bf16.gmra.mrb[0].mxu0 %v331
  %v701 = vpop.f32.mrb[0].mxu0
  %v702 = vadd.f32 0.0, %v701
  %v703 = vpop.f32.mrb[0].mxu0
  %v704 = vadd.f32 0.0, %v703
  %v705 = vpop.f32.mrb[0].mxu0
  %v706 = vadd.f32 0.0, %v705
  %v707 = vpop.f32.mrb[0].mxu0
  %v708 = vadd.f32 0.0, %v707
  %709 = vmatprep.mubr.bf16.mxu0 %v334
  %710 = vmatmul.mubr.bf16.gmra.mrb[0].mxu0 %v333
  %v711 = vpop.f32.mrb[0].mxu0
  %v712 = vadd.f32 0.0, %v711
  %v713 = vpop.f32.mrb[0].mxu0
  %v714 = vadd.f32 0.0, %v713
  %v715 = vpop.f32.mrb[0].mxu0
  %v716 = vadd.f32 0.0, %v715
  %v717 = vpop.f32.mrb[0].mxu0
  %v718 = vadd.f32 0.0, %v717
  %719 = vdwg.mxu0
  %v720 = vadd.f32 %v79, %v562
  %v721 = vadd.f32 %v80, %v564
  %v722 = vadd.f32 %v81, %v566
  %v723 = vadd.f32 %v82, %v568
  %v724 = vadd.f32 %v83, %v572
  %v725 = vadd.f32 %v84, %v574
  %v726 = vadd.f32 %v85, %v576
  %v727 = vadd.f32 %v86, %v578
  %v728 = vadd.f32 %v87, %v582
  %v729 = vadd.f32 %v88, %v584
  %v730 = vadd.f32 %v89, %v586
  %v731 = vadd.f32 %v90, %v588
  %v732 = vadd.f32 %v91, %v592
  %v733 = vadd.f32 %v92, %v594
  %v734 = vadd.f32 %v93, %v596
  %v735 = vadd.f32 %v94, %v598
  %v736 = vadd.f32 %v95, %v602
  %v737 = vadd.f32 %v96, %v604
  %v738 = vadd.f32 %v97, %v606
  %v739 = vadd.f32 %v98, %v608
  %v740 = vadd.f32 %v99, %v612
  %v741 = vadd.f32 %v100, %v614
  %v742 = vadd.f32 %v101, %v616
  %v743 = vadd.f32 %v102, %v618
  %v744 = vadd.f32 %v103, %v622
  %v745 = vadd.f32 %v104, %v624
  %v746 = vadd.f32 %v105, %v626
  %v747 = vadd.f32 %v106, %v628
  %v748 = vadd.f32 %v107, %v632
  %v749 = vadd.f32 %v108, %v634
  %v750 = vadd.f32 %v109, %v636
  %v751 = vadd.f32 %v110, %v638
  %v752 = vadd.f32 %v111, %v642
  %v753 = vadd.f32 %v112, %v644
  %v754 = vadd.f32 %v113, %v646
  %v755 = vadd.f32 %v114, %v648
  %v756 = vadd.f32 %v115, %v652
  %v757 = vadd.f32 %v116, %v654
  %v758 = vadd.f32 %v117, %v656
  %v759 = vadd.f32 %v118, %v658
  %v760 = vadd.f32 %v119, %v662
  %v761 = vadd.f32 %v120, %v664
  %v762 = vadd.f32 %v121, %v666
  %v763 = vadd.f32 %v122, %v668
  %v764 = vadd.f32 %v123, %v672
  %v765 = vadd.f32 %v124, %v674
  %v766 = vadd.f32 %v125, %v676
  %v767 = vadd.f32 %v126, %v678
  %v768 = vadd.f32 %v127, %v682
  %v769 = vadd.f32 %v128, %v684
  %v770 = vadd.f32 %v129, %v686
  %v771 = vadd.f32 %v130, %v688
  %v772 = vadd.f32 %v131, %v692
  %v773 = vadd.f32 %v132, %v694
  %v774 = vadd.f32 %v133, %v696
  %v775 = vadd.f32 %v134, %v698
  %v776 = vadd.f32 %v135, %v702
  %v777 = vadd.f32 %v136, %v704
  %v778 = vadd.f32 %v137, %v706
  %v779 = vadd.f32 %v138, %v708
  %v780 = vadd.f32 %v139, %v712
  %v781 = vadd.f32 %v140, %v714
  %v782 = vadd.f32 %v141, %v716
  %v783 = vadd.f32 %v142, %v718
  %784 = vst [vmem:[#allocation2] sm:$0xff] %v720
  %785 = vst [vmem:[#allocation2 + $0x8] sm:$0xff] %v721
  %786 = vst [vmem:[#allocation2 + $0x10] sm:$0xff] %v722
  %787 = vst [vmem:[#allocation2 + $0x18] sm:$0xff] %v723
  %788 = vst [vmem:[#allocation2 + $0x20] sm:$0xff] %v724
  %789 = vst [vmem:[#allocation2 + $0x28] sm:$0xff] %v725
  %790 = vst [vmem:[#allocation2 + $0x30] sm:$0xff] %v726
  %791 = vst [vmem:[#allocation2 + $0x38] sm:$0xff] %v727
  %792 = vst [vmem:[#allocation2 + $0x40] sm:$0xff] %v728
  %793 = vst [vmem:[#allocation2 + $0x48] sm:$0xff] %v729
  %794 = vst [vmem:[#allocation2 + $0x50] sm:$0xff] %v730
  %795 = vst [vmem:[#allocation2 + $0x58] sm:$0xff] %v731
  %796 = vst [vmem:[#allocation2 + $0x60] sm:$0xff] %v732
  %797 = vst [vmem:[#allocation2 + $0x68] sm:$0xff] %v733
  %798 = vst [vmem:[#allocation2 + $0x70] sm:$0xff] %v734
  %799 = vst [vmem:[#allocation2 + $0x78] sm:$0xff] %v735
  %800 = vst [vmem:[#allocation2 + $0x80] sm:$0xff] %v736
  %801 = vst [vmem:[#allocation2 + $0x88] sm:$0xff] %v737
  %802 = vst [vmem:[#allocation2 + $0x90] sm:$0xff] %v738
  %803 = vst [vmem:[#allocation2 + $0x98] sm:$0xff] %v739
  %804 = vst [vmem:[#allocation2 + $0xa0] sm:$0xff] %v740
  %805 = vst [vmem:[#allocation2 + $0xa8] sm:$0xff] %v741
  %806 = vst [vmem:[#allocation2 + $0xb0] sm:$0xff] %v742
  %807 = vst [vmem:[#allocation2 + $0xb8] sm:$0xff] %v743
  %808 = vst [vmem:[#allocation2 + $0xc0] sm:$0xff] %v744
  %809 = vst [vmem:[#allocation2 + $0xc8] sm:$0xff] %v745
  %810 = vst [vmem:[#allocation2 + $0xd0] sm:$0xff] %v746
  %811 = vst [vmem:[#allocation2 + $0xd8] sm:$0xff] %v747
  %812 = vst [vmem:[#allocation2 + $0xe0] sm:$0xff] %v748
  %813 = vst [vmem:[#allocation2 + $0xe8] sm:$0xff] %v749
  %814 = vst [vmem:[#allocation2 + $0xf0] sm:$0xff] %v750
  %815 = vst [vmem:[#allocation2 + $0xf8] sm:$0xff] %v751
  %816 = vst [vmem:[#allocation2 + $0x100] sm:$0xff] %v752
  %817 = vst [vmem:[#allocation2 + $0x108] sm:$0xff] %v753
  %818 = vst [vmem:[#allocation2 + $0x110] sm:$0xff] %v754
  %819 = vst [vmem:[#allocation2 + $0x118] sm:$0xff] %v755
  %820 = vst [vmem:[#allocation2 + $0x120] sm:$0xff] %v756
  %821 = vst [vmem:[#allocation2 + $0x128] sm:$0xff] %v757
  %822 = vst [vmem:[#allocation2 + $0x130] sm:$0xff] %v758
  %823 = vst [vmem:[#allocation2 + $0x138] sm:$0xff] %v759
  %824 = vst [vmem:[#allocation2 + $0x140] sm:$0xff] %v760
  %825 = vst [vmem:[#allocation2 + $0x148] sm:$0xff] %v761
  %826 = vst [vmem:[#allocation2 + $0x150] sm:$0xff] %v762
  %827 = vst [vmem:[#allocation2 + $0x158] sm:$0xff] %v763
  %828 = vst [vmem:[#allocation2 + $0x160] sm:$0xff] %v764
  %829 = vst [vmem:[#allocation2 + $0x168] sm:$0xff] %v765
  %830 = vst [vmem:[#allocation2 + $0x170] sm:$0xff] %v766
  %831 = vst [vmem:[#allocation2 + $0x178] sm:$0xff] %v767
  %832 = vst [vmem:[#allocation2 + $0x180] sm:$0xff] %v768
  %833 = vst [vmem:[#allocation2 + $0x188] sm:$0xff] %v769
  %834 = vst [vmem:[#allocation2 + $0x190] sm:$0xff] %v770
  %835 = vst [vmem:[#allocation2 + $0x198] sm:$0xff] %v771
  %836 = vst [vmem:[#allocation2 + $0x1a0] sm:$0xff] %v772
  %837 = vst [vmem:[#allocation2 + $0x1a8] sm:$0xff] %v773
  %838 = vst [vmem:[#allocation2 + $0x1b0] sm:$0xff] %v774
  %839 = vst [vmem:[#allocation2 + $0x1b8] sm:$0xff] %v775
  %840 = vst [vmem:[#allocation2 + $0x1c0] sm:$0xff] %v776
  %841 = vst [vmem:[#allocation2 + $0x1c8] sm:$0xff] %v777
  %842 = vst [vmem:[#allocation2 + $0x1d0] sm:$0xff] %v778
  %843 = vst [vmem:[#allocation2 + $0x1d8] sm:$0xff] %v779
  %844 = vst [vmem:[#allocation2 + $0x1e0] sm:$0xff] %v780
  %845 = vst [vmem:[#allocation2 + $0x1e8] sm:$0xff] %v781
  %846 = vst [vmem:[#allocation2 + $0x1f0] sm:$0xff] %v782
  %847 = vst [vmem:[#allocation2 + $0x1f8] sm:$0xff] %v783
  // Predicated region
  $region14: #{graph_convolution.2} parent=0 // pred_check
    %p848 = pneg %p11
  $region15: #{graph_convolution.2} parent=0 // pred_check_branch
    %850 = sbr.rel (%p848) target = $region17
  $region16: #{graph_convolution.2} parent=0 // pred_region
    %v851 = vld [vmem:[#allocation2] sm:$0xff]
    %v852 = vld [vmem:[#allocation2 + $0x8] sm:$0xff]
    %v853 = vld [vmem:[#allocation2 + $0x10] sm:$0xff]
    %v854 = vld [vmem:[#allocation2 + $0x18] sm:$0xff]
    %v855 = vld [vmem:[#allocation2 + $0x20] sm:$0xff]
    %v856 = vld [vmem:[#allocation2 + $0x28] sm:$0xff]
    %v857 = vld [vmem:[#allocation2 + $0x30] sm:$0xff]
    %v858 = vld [vmem:[#allocation2 + $0x38] sm:$0xff]
    %v859 = vld [vmem:[#allocation2 + $0x40] sm:$0xff]
    %v860 = vld [vmem:[#allocation2 + $0x48] sm:$0xff]
    %v861 = vld [vmem:[#allocation2 + $0x50] sm:$0xff]
    %v862 = vld [vmem:[#allocation2 + $0x58] sm:$0xff]
    %v863 = vld [vmem:[#allocation2 + $0x60] sm:$0xff]
    %v864 = vld [vmem:[#allocation2 + $0x68] sm:$0xff]
    %v865 = vld [vmem:[#allocation2 + $0x70] sm:$0xff]
    %v866 = vld [vmem:[#allocation2 + $0x78] sm:$0xff]
    %v867 = vld [vmem:[#allocation2 + $0x80] sm:$0xff]
    %v868 = vld [vmem:[#allocation2 + $0x88] sm:$0xff]
    %v869 = vld [vmem:[#allocation2 + $0x90] sm:$0xff]
    %v870 = vld [vmem:[#allocation2 + $0x98] sm:$0xff]
    %v871 = vld [vmem:[#allocation2 + $0xa0] sm:$0xff]
    %v872 = vld [vmem:[#allocation2 + $0xa8] sm:$0xff]
    %v873 = vld [vmem:[#allocation2 + $0xb0] sm:$0xff]
    %v874 = vld [vmem:[#allocation2 + $0xb8] sm:$0xff]
    %v875 = vld [vmem:[#allocation2 + $0xc0] sm:$0xff]
    %v876 = vld [vmem:[#allocation2 + $0xc8] sm:$0xff]
    %v877 = vld [vmem:[#allocation2 + $0xd0] sm:$0xff]
    %v878 = vld [vmem:[#allocation2 + $0xd8] sm:$0xff]
    %v879 = vld [vmem:[#allocation2 + $0xe0] sm:$0xff]
    %v880 = vld [vmem:[#allocation2 + $0xe8] sm:$0xff]
    %v881 = vld [vmem:[#allocation2 + $0xf0] sm:$0xff]
    %v882 = vld [vmem:[#allocation2 + $0xf8] sm:$0xff]
    %v883 = vld [vmem:[#allocation2 + $0x100] sm:$0xff]
    %v884 = vld [vmem:[#allocation2 + $0x108] sm:$0xff]
    %v885 = vld [vmem:[#allocation2 + $0x110] sm:$0xff]
    %v886 = vld [vmem:[#allocation2 + $0x118] sm:$0xff]
    %v887 = vld [vmem:[#allocation2 + $0x120] sm:$0xff]
    %v888 = vld [vmem:[#allocation2 + $0x128] sm:$0xff]
    %v889 = vld [vmem:[#allocation2 + $0x130] sm:$0xff]
    %v890 = vld [vmem:[#allocation2 + $0x138] sm:$0xff]
    %v891 = vld [vmem:[#allocation2 + $0x140] sm:$0xff]
    %v892 = vld [vmem:[#allocation2 + $0x148] sm:$0xff]
    %v893 = vld [vmem:[#allocation2 + $0x150] sm:$0xff]
    %v894 = vld [vmem:[#allocation2 + $0x158] sm:$0xff]
    %v895 = vld [vmem:[#allocation2 + $0x160] sm:$0xff]
    %v896 = vld [vmem:[#allocation2 + $0x168] sm:$0xff]
    %v897 = vld [vmem:[#allocation2 + $0x170] sm:$0xff]
    %v898 = vld [vmem:[#allocation2 + $0x178] sm:$0xff]
    %v899 = vld [vmem:[#allocation2 + $0x180] sm:$0xff]
    %v900 = vld [vmem:[#allocation2 + $0x188] sm:$0xff]
    %v901 = vld [vmem:[#allocation2 + $0x190] sm:$0xff]
    %v902 = vld [vmem:[#allocation2 + $0x198] sm:$0xff]
    %v903 = vld [vmem:[#allocation2 + $0x1a0] sm:$0xff]
    %v904 = vld [vmem:[#allocation2 + $0x1a8] sm:$0xff]
    %v905 = vld [vmem:[#allocation2 + $0x1b0] sm:$0xff]
    %v906 = vld [vmem:[#allocation2 + $0x1b8] sm:$0xff]
    %v907 = vld [vmem:[#allocation2 + $0x1c0] sm:$0xff]
    %v908 = vld [vmem:[#allocation2 + $0x1c8] sm:$0xff]
    %v909 = vld [vmem:[#allocation2 + $0x1d0] sm:$0xff]
    %v910 = vld [vmem:[#allocation2 + $0x1d8] sm:$0xff]
    %v911 = vld [vmem:[#allocation2 + $0x1e0] sm:$0xff]
    %v912 = vld [vmem:[#allocation2 + $0x1e8] sm:$0xff]
    %v913 = vld [vmem:[#allocation2 + $0x1f0] sm:$0xff]
    %v914 = vld [vmem:[#allocation2 + $0x1f8] sm:$0xff]
    %v915 = vpack.c.bf16 %v853, %v851
    %v916 = vpack.c.bf16 %v854, %v852
    %v917 = vpack.c.bf16 %v857, %v855
    %v918 = vpack.c.bf16 %v858, %v856
    %v919 = vpack.c.bf16 %v861, %v859
    %v920 = vpack.c.bf16 %v862, %v860
    %v921 = vpack.c.bf16 %v865, %v863
    %v922 = vpack.c.bf16 %v866, %v864
    %v923 = vpack.c.bf16 %v869, %v867
    %v924 = vpack.c.bf16 %v870, %v868
    %v925 = vpack.c.bf16 %v873, %v871
    %v926 = vpack.c.bf16 %v874, %v872
    %v927 = vpack.c.bf16 %v877, %v875
    %v928 = vpack.c.bf16 %v878, %v876
    %v929 = vpack.c.bf16 %v881, %v879
    %v930 = vpack.c.bf16 %v882, %v880
    %v931 = vpack.c.bf16 %v885, %v883
    %v932 = vpack.c.bf16 %v886, %v884
    %v933 = vpack.c.bf16 %v889, %v887
    %v934 = vpack.c.bf16 %v890, %v888
    %v935 = vpack.c.bf16 %v893, %v891
    %v936 = vpack.c.bf16 %v894, %v892
    %v937 = vpack.c.bf16 %v897, %v895
    %v938 = vpack.c.bf16 %v898, %v896
    %v939 = vpack.c.bf16 %v901, %v899
    %v940 = vpack.c.bf16 %v902, %v900
    %v941 = vpack.c.bf16 %v905, %v903
    %v942 = vpack.c.bf16 %v906, %v904
    %v943 = vpack.c.bf16 %v909, %v907
    %v944 = vpack.c.bf16 %v910, %v908
    %v945 = vpack.c.bf16 %v913, %v911
    %v946 = vpack.c.bf16 %v914, %v912
    %v979 = vunpack.c.l.b16 %v915
    %v980 = vunpack.c.l.b16 %v916
    %v981 = vunpack.c.h.b16 %v915
    %v982 = vunpack.c.h.b16 %v916
    %v983 = vunpack.c.l.b16 %v917
    %v984 = vunpack.c.l.b16 %v918
    %v985 = vunpack.c.h.b16 %v917
    %v986 = vunpack.c.h.b16 %v918
    %v987 = vunpack.c.l.b16 %v919
    %v988 = vunpack.c.l.b16 %v920
    %v989 = vunpack.c.h.b16 %v919
    %v990 = vunpack.c.h.b16 %v920
    %v991 = vunpack.c.l.b16 %v921
    %v992 = vunpack.c.l.b16 %v922
    %v993 = vunpack.c.h.b16 %v921
    %v994 = vunpack.c.h.b16 %v922
    %v995 = vunpack.c.l.b16 %v923
    %v996 = vunpack.c.l.b16 %v924
    %v997 = vunpack.c.h.b16 %v923
    %v998 = vunpack.c.h.b16 %v924
    %v999 = vunpack.c.l.b16 %v925
    %v1000 = vunpack.c.l.b16 %v926
    %v1001 = vunpack.c.h.b16 %v925
    %v1002 = vunpack.c.h.b16 %v926
    %v1003 = vunpack.c.l.b16 %v927
    %v1004 = vunpack.c.l.b16 %v928
    %v1005 = vunpack.c.h.b16 %v927
    %v1006 = vunpack.c.h.b16 %v928
    %v1007 = vunpack.c.l.b16 %v929
    %v1008 = vunpack.c.l.b16 %v930
    %v1009 = vunpack.c.h.b16 %v929
    %v1010 = vunpack.c.h.b16 %v930
    %v1011 = vunpack.c.l.b16 %v931
    %v1012 = vunpack.c.l.b16 %v932
    %v1013 = vunpack.c.h.b16 %v931
    %v1014 = vunpack.c.h.b16 %v932
    %v1015 = vunpack.c.l.b16 %v933
    %v1016 = vunpack.c.l.b16 %v934
    %v1017 = vunpack.c.h.b16 %v933
    %v1018 = vunpack.c.h.b16 %v934
    %v1019 = vunpack.c.l.b16 %v935
    %v1020 = vunpack.c.l.b16 %v936
    %v1021 = vunpack.c.h.b16 %v935
    %v1022 = vunpack.c.h.b16 %v936
    %v1023 = vunpack.c.l.b16 %v937
    %v1024 = vunpack.c.l.b16 %v938
    %v1025 = vunpack.c.h.b16 %v937
    %v1026 = vunpack.c.h.b16 %v938
    %v1027 = vunpack.c.l.b16 %v939
    %v1028 = vunpack.c.l.b16 %v940
    %v1029 = vunpack.c.h.b16 %v939
    %v1030 = vunpack.c.h.b16 %v940
    %v1031 = vunpack.c.l.b16 %v941
    %v1032 = vunpack.c.l.b16 %v942
    %v1033 = vunpack.c.h.b16 %v941
    %v1034 = vunpack.c.h.b16 %v942
    %v1035 = vunpack.c.l.b16 %v943
    %v1036 = vunpack.c.l.b16 %v944
    %v1037 = vunpack.c.h.b16 %v943
    %v1038 = vunpack.c.h.b16 %v944
    %v1039 = vunpack.c.l.b16 %v945
    %v1040 = vunpack.c.l.b16 %v946
    %v1041 = vunpack.c.h.b16 %v945
    %v1042 = vunpack.c.h.b16 %v946
    %v1043 = vpack.c.b16 %v980, %v979
    %v1044 = vpack.c.b16 %v982, %v981
    %v1045 = vpack.c.b16 %v984, %v983
    %v1046 = vpack.c.b16 %v986, %v985
    %v1047 = vpack.c.b16 %v988, %v987
    %v1048 = vpack.c.b16 %v990, %v989
    %v1049 = vpack.c.b16 %v992, %v991
    %v1050 = vpack.c.b16 %v994, %v993
    %v1051 = vpack.c.b16 %v996, %v995
    %v1052 = vpack.c.b16 %v998, %v997
    %v1053 = vpack.c.b16 %v1000, %v999
    %v1054 = vpack.c.b16 %v1002, %v1001
    %v1055 = vpack.c.b16 %v1004, %v1003
    %v1056 = vpack.c.b16 %v1006, %v1005
    %v1057 = vpack.c.b16 %v1008, %v1007
    %v1058 = vpack.c.b16 %v1010, %v1009
    %v1059 = vpack.c.b16 %v1012, %v1011
    %v1060 = vpack.c.b16 %v1014, %v1013
    %v1061 = vpack.c.b16 %v1016, %v1015
    %v1062 = vpack.c.b16 %v1018, %v1017
    %v1063 = vpack.c.b16 %v1020, %v1019
    %v1064 = vpack.c.b16 %v1022, %v1021
    %v1065 = vpack.c.b16 %v1024, %v1023
    %v1066 = vpack.c.b16 %v1026, %v1025
    %v1067 = vpack.c.b16 %v1028, %v1027
    %v1068 = vpack.c.b16 %v1030, %v1029
    %v1069 = vpack.c.b16 %v1032, %v1031
    %v1070 = vpack.c.b16 %v1034, %v1033
    %v1071 = vpack.c.b16 %v1036, %v1035
    %v1072 = vpack.c.b16 %v1038, %v1037
    %v1073 = vpack.c.b16 %v1040, %v1039
    %v1074 = vpack.c.b16 %v1042, %v1041
    %1107 = vst [vmem:[%s2] sm:$0xff] %v1043
    %1108 = vst [vmem:[%s2 + $0x8] sm:$0xff] %v1044
    %1109 = vst [vmem:[%s2 + $0x10] sm:$0xff] %v1045
    %1110 = vst [vmem:[%s2 + $0x18] sm:$0xff] %v1046
    %1111 = vst [vmem:[%s2 + $0x20] sm:$0xff] %v1047
    %1112 = vst [vmem:[%s2 + $0x28] sm:$0xff] %v1048
    %1113 = vst [vmem:[%s2 + $0x30] sm:$0xff] %v1049
    %1114 = vst [vmem:[%s2 + $0x38] sm:$0xff] %v1050
    %1115 = vst [vmem:[%s2 + $0x40] sm:$0xff] %v1051
    %1116 = vst [vmem:[%s2 + $0x48] sm:$0xff] %v1052
    %1117 = vst [vmem:[%s2 + $0x50] sm:$0xff] %v1053
    %1118 = vst [vmem:[%s2 + $0x58] sm:$0xff] %v1054
    %1119 = vst [vmem:[%s2 + $0x60] sm:$0xff] %v1055
    %1120 = vst [vmem:[%s2 + $0x68] sm:$0xff] %v1056
    %1121 = vst [vmem:[%s2 + $0x70] sm:$0xff] %v1057
    %1122 = vst [vmem:[%s2 + $0x78] sm:$0xff] %v1058
    %1123 = vst [vmem:[%s2 + $0x80] sm:$0xff] %v1059
    %1124 = vst [vmem:[%s2 + $0x88] sm:$0xff] %v1060
    %1125 = vst [vmem:[%s2 + $0x90] sm:$0xff] %v1061
    %1126 = vst [vmem:[%s2 + $0x98] sm:$0xff] %v1062
    %1127 = vst [vmem:[%s2 + $0xa0] sm:$0xff] %v1063
    %1128 = vst [vmem:[%s2 + $0xa8] sm:$0xff] %v1064
    %1129 = vst [vmem:[%s2 + $0xb0] sm:$0xff] %v1065
    %1130 = vst [vmem:[%s2 + $0xb8] sm:$0xff] %v1066
    %1131 = vst [vmem:[%s2 + $0xc0] sm:$0xff] %v1067
    %1132 = vst [vmem:[%s2 + $0xc8] sm:$0xff] %v1068
    %1133 = vst [vmem:[%s2 + $0xd0] sm:$0xff] %v1069
    %1134 = vst [vmem:[%s2 + $0xd8] sm:$0xff] %v1070
    %1135 = vst [vmem:[%s2 + $0xe0] sm:$0xff] %v1071
    %1136 = vst [vmem:[%s2 + $0xe8] sm:$0xff] %v1072
    %1137 = vst [vmem:[%s2 + $0xf0] sm:$0xff] %v1073
    %1138 = vst [vmem:[%s2 + $0xf8] sm:$0xff] %v1074
  $region17: #{graph_convolution.2} parent=0 // pred_fallthru
    _
  // Predicated region
  $region18: #{graph_convolution.2} parent=0 // pred_check
    _
  $region19: #{graph_convolution.2} parent=0 // pred_check_branch
    %1140 = sbr.rel (0) target = $region21
  $region20: #{graph_convolution.2} parent=0 // pred_region
    _
  $region21: #{graph_convolution.2} parent=0 // pred_fallthru
    _
  // Predicated region
  $region22: #{graph_convolution.2} parent=0 // pred_check
    _
  $region23: #{graph_convolution.2} parent=0 // pred_check_branch
    %1142 = sbr.rel (0) target = $region25
  $region24: #{graph_convolution.2} parent=0 // pred_region
    _
  $region25: #{graph_convolution.2} parent=0 // pred_fallthru
    _

// kernel: graph_convolution.3
$region0: #{graph_convolution.3}
  #allocation0 [shape = 'u32[]', space=smem, size = 0x4, offset = 0x4, fixed_abs, tag = 'smem constant byte address 0x4 - core index']
  #allocation1 [shape = 'u32[144,128]{1,0:T(1,128)}', space=vmem, size = 0x12000, scoped, tag = 'internal scratch']
  #allocation2 [shape = 'f32[256,256]{1,0:T(8,128)}', space=vmem, size = 0x40000, scoped, tag = 'scratch operand']
  %s0 = inlined_call_operand.vmem [shape: bf16[256,256], index: 0, kind: input, shape index: {}]
  %s1 = inlined_call_operand.vmem [shape: bf16[256,256], index: 1, kind: input, shape index: {}]
  %s2 = inlined_call_operand.vmem [shape: f32[1,256], index: 2, kind: input, shape index: {}]
  %s3 = inlined_call_operand.vmem [shape: f32[256,256], index: 3, kind: output, shape index: {}]
  %s4 = sld [smem:[#allocation0]]
  $region30: #{graph_convolution.3} parent=0
    _
  %s6 = ssub.s32 1, %s4
  %s7 = scalar_select 0, %s6, %s4
  // Predicated region
  $region2: #{graph_convolution.3} parent=0 // pred_check
    _
  $region3: #{graph_convolution.3} parent=0 // pred_check_branch
    %9 = sbr.rel (0) target = $region5
  $region4: #{graph_convolution.3} parent=0 // pred_region
    _
  $region5: #{graph_convolution.3} parent=0 // pred_fallthru
    _
  // Predicated region
  $region6: #{graph_convolution.3} parent=0 // pred_check
    _
  $region7: #{graph_convolution.3} parent=0 // pred_check_branch
    %11 = sbr.rel (0) target = $region9
  $region8: #{graph_convolution.3} parent=0 // pred_region
    _
  $region9: #{graph_convolution.3} parent=0 // pred_fallthru
    _
  // Predicated region
  $region10: #{graph_convolution.3} parent=0 // pred_check
    _
  $region11: #{graph_convolution.3} parent=0 // pred_check_branch
    %13 = sbr.rel (0) target = $region13
  $region12: #{graph_convolution.3} parent=0 // pred_region
    _
  $region13: #{graph_convolution.3} parent=0 // pred_fallthru
    _
  %p14 = scmp.eq.s32.totalorder 0, 0
  // Predicated region
  $region14: #{graph_convolution.3} parent=0 // pred_check
    %p15 = pneg %p14
  $region15: #{graph_convolution.3} parent=0 // pred_check_branch
    %17 = sbr.rel (%p15) target = $region17
  $region16: #{graph_convolution.3} parent=0 // pred_region
    %18 = vst [vmem:[#allocation2] sm:$0xff] 0.0
    %19 = vst [vmem:[#allocation2 + $0x8] sm:$0xff] 0.0
    %20 = vst [vmem:[#allocation2 + $0x10] sm:$0xff] 0.0
    %21 = vst [vmem:[#allocation2 + $0x18] sm:$0xff] 0.0
    %22 = vst [vmem:[#allocation2 + $0x20] sm:$0xff] 0.0
    %23 = vst [vmem:[#allocation2 + $0x28] sm:$0xff] 0.0
    %24 = vst [vmem:[#allocation2 + $0x30] sm:$0xff] 0.0
    %25 = vst [vmem:[#allocation2 + $0x38] sm:$0xff] 0.0
    %26 = vst [vmem:[#allocation2 + $0x40] sm:$0xff] 0.0
    %27 = vst [vmem:[#allocation2 + $0x48] sm:$0xff] 0.0
    %28 = vst [vmem:[#allocation2 + $0x50] sm:$0xff] 0.0
    %29 = vst [vmem:[#allocation2 + $0x58] sm:$0xff] 0.0
    %30 = vst [vmem:[#allocation2 + $0x60] sm:$0xff] 0.0
    %31 = vst [vmem:[#allocation2 + $0x68] sm:$0xff] 0.0
    %32 = vst [vmem:[#allocation2 + $0x70] sm:$0xff] 0.0
    %33 = vst [vmem:[#allocation2 + $0x78] sm:$0xff] 0.0
    %34 = vst [vmem:[#allocation2 + $0x80] sm:$0xff] 0.0
    %35 = vst [vmem:[#allocation2 + $0x88] sm:$0xff] 0.0
    %36 = vst [vmem:[#allocation2 + $0x90] sm:$0xff] 0.0
    %37 = vst [vmem:[#allocation2 + $0x98] sm:$0xff] 0.0
    %38 = vst [vmem:[#allocation2 + $0xa0] sm:$0xff] 0.0
    %39 = vst [vmem:[#allocation2 + $0xa8] sm:$0xff] 0.0
    %40 = vst [vmem:[#allocation2 + $0xb0] sm:$0xff] 0.0
    %41 = vst [vmem:[#allocation2 + $0xb8] sm:$0xff] 0.0
    %42 = vst [vmem:[#allocation2 + $0xc0] sm:$0xff] 0.0
    %43 = vst [vmem:[#allocation2 + $0xc8] sm:$0xff] 0.0
    %44 = vst [vmem:[#allocation2 + $0xd0] sm:$0xff] 0.0
    %45 = vst [vmem:[#allocation2 + $0xd8] sm:$0xff] 0.0
    %46 = vst [vmem:[#allocation2 + $0xe0] sm:$0xff] 0.0
    %47 = vst [vmem:[#allocation2 + $0xe8] sm:$0xff] 0.0
    %48 = vst [vmem:[#allocation2 + $0xf0] sm:$0xff] 0.0
    %49 = vst [vmem:[#allocation2 + $0xf8] sm:$0xff] 0.0
    %50 = vst [vmem:[#allocation2 + $0x100] sm:$0xff] 0.0
    %51 = vst [vmem:[#allocation2 + $0x108] sm:$0xff] 0.0
    %52 = vst [vmem:[#allocation2 + $0x110] sm:$0xff] 0.0
    %53 = vst [vmem:[#allocation2 + $0x118] sm:$0xff] 0.0
    %54 = vst [vmem:[#allocation2 + $0x120] sm:$0xff] 0.0
    %55 = vst [vmem:[#allocation2 + $0x128] sm:$0xff] 0.0
    %56 = vst [vmem:[#allocation2 + $0x130] sm:$0xff] 0.0
    %57 = vst [vmem:[#allocation2 + $0x138] sm:$0xff] 0.0
    %58 = vst [vmem:[#allocation2 + $0x140] sm:$0xff] 0.0
    %59 = vst [vmem:[#allocation2 + $0x148] sm:$0xff] 0.0
    %60 = vst [vmem:[#allocation2 + $0x150] sm:$0xff] 0.0
    %61 = vst [vmem:[#allocation2 + $0x158] sm:$0xff] 0.0
    %62 = vst [vmem:[#allocation2 + $0x160] sm:$0xff] 0.0
    %63 = vst [vmem:[#allocation2 + $0x168] sm:$0xff] 0.0
    %64 = vst [vmem:[#allocation2 + $0x170] sm:$0xff] 0.0
    %65 = vst [vmem:[#allocation2 + $0x178] sm:$0xff] 0.0
    %66 = vst [vmem:[#allocation2 + $0x180] sm:$0xff] 0.0
    %67 = vst [vmem:[#allocation2 + $0x188] sm:$0xff] 0.0
    %68 = vst [vmem:[#allocation2 + $0x190] sm:$0xff] 0.0
    %69 = vst [vmem:[#allocation2 + $0x198] sm:$0xff] 0.0
    %70 = vst [vmem:[#allocation2 + $0x1a0] sm:$0xff] 0.0
    %71 = vst [vmem:[#allocation2 + $0x1a8] sm:$0xff] 0.0
    %72 = vst [vmem:[#allocation2 + $0x1b0] sm:$0xff] 0.0
    %73 = vst [vmem:[#allocation2 + $0x1b8] sm:$0xff] 0.0
    %74 = vst [vmem:[#allocation2 + $0x1c0] sm:$0xff] 0.0
    %75 = vst [vmem:[#allocation2 + $0x1c8] sm:$0xff] 0.0
    %76 = vst [vmem:[#allocation2 + $0x1d0] sm:$0xff] 0.0
    %77 = vst [vmem:[#allocation2 + $0x1d8] sm:$0xff] 0.0
    %78 = vst [vmem:[#allocation2 + $0x1e0] sm:$0xff] 0.0
    %79 = vst [vmem:[#allocation2 + $0x1e8] sm:$0xff] 0.0
    %80 = vst [vmem:[#allocation2 + $0x1f0] sm:$0xff] 0.0
    %81 = vst [vmem:[#allocation2 + $0x1f8] sm:$0xff] 0.0
  $region17: #{graph_convolution.3} parent=0 // pred_fallthru
    _
  %s82 = smul.u32 0, 256
  %v83 = vld [vmem:[#allocation2] sm:$0xff]
  %v84 = vld [vmem:[#allocation2 + $0x8] sm:$0xff]
  %v85 = vld [vmem:[#allocation2 + $0x10] sm:$0xff]
  %v86 = vld [vmem:[#allocation2 + $0x18] sm:$0xff]
  %v87 = vld [vmem:[#allocation2 + $0x20] sm:$0xff]
  %v88 = vld [vmem:[#allocation2 + $0x28] sm:$0xff]
  %v89 = vld [vmem:[#allocation2 + $0x30] sm:$0xff]
  %v90 = vld [vmem:[#allocation2 + $0x38] sm:$0xff]
  %v91 = vld [vmem:[#allocation2 + $0x40] sm:$0xff]
  %v92 = vld [vmem:[#allocation2 + $0x48] sm:$0xff]
  %v93 = vld [vmem:[#allocation2 + $0x50] sm:$0xff]
  %v94 = vld [vmem:[#allocation2 + $0x58] sm:$0xff]
  %v95 = vld [vmem:[#allocation2 + $0x60] sm:$0xff]
  %v96 = vld [vmem:[#allocation2 + $0x68] sm:$0xff]
  %v97 = vld [vmem:[#allocation2 + $0x70] sm:$0xff]
  %v98 = vld [vmem:[#allocation2 + $0x78] sm:$0xff]
  %v99 = vld [vmem:[#allocation2 + $0x80] sm:$0xff]
  %v100 = vld [vmem:[#allocation2 + $0x88] sm:$0xff]
  %v101 = vld [vmem:[#allocation2 + $0x90] sm:$0xff]
  %v102 = vld [vmem:[#allocation2 + $0x98] sm:$0xff]
  %v103 = vld [vmem:[#allocation2 + $0xa0] sm:$0xff]
  %v104 = vld [vmem:[#allocation2 + $0xa8] sm:$0xff]
  %v105 = vld [vmem:[#allocation2 + $0xb0] sm:$0xff]
  %v106 = vld [vmem:[#allocation2 + $0xb8] sm:$0xff]
  %v107 = vld [vmem:[#allocation2 + $0xc0] sm:$0xff]
  %v108 = vld [vmem:[#allocation2 + $0xc8] sm:$0xff]
  %v109 = vld [vmem:[#allocation2 + $0xd0] sm:$0xff]
  %v110 = vld [vmem:[#allocation2 + $0xd8] sm:$0xff]
  %v111 = vld [vmem:[#allocation2 + $0xe0] sm:$0xff]
  %v112 = vld [vmem:[#allocation2 + $0xe8] sm:$0xff]
  %v113 = vld [vmem:[#allocation2 + $0xf0] sm:$0xff]
  %v114 = vld [vmem:[#allocation2 + $0xf8] sm:$0xff]
  %v115 = vld [vmem:[#allocation2 + $0x100] sm:$0xff]
  %v116 = vld [vmem:[#allocation2 + $0x108] sm:$0xff]
  %v117 = vld [vmem:[#allocation2 + $0x110] sm:$0xff]
  %v118 = vld [vmem:[#allocation2 + $0x118] sm:$0xff]
  %v119 = vld [vmem:[#allocation2 + $0x120] sm:$0xff]
  %v120 = vld [vmem:[#allocation2 + $0x128] sm:$0xff]
  %v121 = vld [vmem:[#allocation2 + $0x130] sm:$0xff]
  %v122 = vld [vmem:[#allocation2 + $0x138] sm:$0xff]
  %v123 = vld [vmem:[#allocation2 + $0x140] sm:$0xff]
  %v124 = vld [vmem:[#allocation2 + $0x148] sm:$0xff]
  %v125 = vld [vmem:[#allocation2 + $0x150] sm:$0xff]
  %v126 = vld [vmem:[#allocation2 + $0x158] sm:$0xff]
  %v127 = vld [vmem:[#allocation2 + $0x160] sm:$0xff]
  %v128 = vld [vmem:[#allocation2 + $0x168] sm:$0xff]
  %v129 = vld [vmem:[#allocation2 + $0x170] sm:$0xff]
  %v130 = vld [vmem:[#allocation2 + $0x178] sm:$0xff]
  %v131 = vld [vmem:[#allocation2 + $0x180] sm:$0xff]
  %v132 = vld [vmem:[#allocation2 + $0x188] sm:$0xff]
  %v133 = vld [vmem:[#allocation2 + $0x190] sm:$0xff]
  %v134 = vld [vmem:[#allocation2 + $0x198] sm:$0xff]
  %v135 = vld [vmem:[#allocation2 + $0x1a0] sm:$0xff]
  %v136 = vld [vmem:[#allocation2 + $0x1a8] sm:$0xff]
  %v137 = vld [vmem:[#allocation2 + $0x1b0] sm:$0xff]
  %v138 = vld [vmem:[#allocation2 + $0x1b8] sm:$0xff]
  %v139 = vld [vmem:[#allocation2 + $0x1c0] sm:$0xff]
  %v140 = vld [vmem:[#allocation2 + $0x1c8] sm:$0xff]
  %v141 = vld [vmem:[#allocation2 + $0x1d0] sm:$0xff]
  %v142 = vld [vmem:[#allocation2 + $0x1d8] sm:$0xff]
  %v143 = vld [vmem:[#allocation2 + $0x1e0] sm:$0xff]
  %v144 = vld [vmem:[#allocation2 + $0x1e8] sm:$0xff]
  %v145 = vld [vmem:[#allocation2 + $0x1f0] sm:$0xff]
  %v146 = vld [vmem:[#allocation2 + $0x1f8] sm:$0xff]
  %v147 = vld [vmem:[%s0] sm:$0xff]
  %v148 = vld [vmem:[%s0 + $0x8] sm:$0xff]
  %v149 = vld [vmem:[%s0 + $0x10] sm:$0xff]
  %v150 = vld [vmem:[%s0 + $0x18] sm:$0xff]
  %v151 = vld [vmem:[%s0 + $0x20] sm:$0xff]
  %v152 = vld [vmem:[%s0 + $0x28] sm:$0xff]
  %v153 = vld [vmem:[%s0 + $0x30] sm:$0xff]
  %v154 = vld [vmem:[%s0 + $0x38] sm:$0xff]
  %v155 = vld [vmem:[%s0 + $0x40] sm:$0xff]
  %v156 = vld [vmem:[%s0 + $0x48] sm:$0xff]
  %v157 = vld [vmem:[%s0 + $0x50] sm:$0xff]
  %v158 = vld [vmem:[%s0 + $0x58] sm:$0xff]
  %v159 = vld [vmem:[%s0 + $0x60] sm:$0xff]
  %v160 = vld [vmem:[%s0 + $0x68] sm:$0xff]
  %v161 = vld [vmem:[%s0 + $0x70] sm:$0xff]
  %v162 = vld [vmem:[%s0 + $0x78] sm:$0xff]
  %v163 = vld [vmem:[%s0 + $0x80] sm:$0xff]
  %v164 = vld [vmem:[%s0 + $0x88] sm:$0xff]
  %v165 = vld [vmem:[%s0 + $0x90] sm:$0xff]
  %v166 = vld [vmem:[%s0 + $0x98] sm:$0xff]
  %v167 = vld [vmem:[%s0 + $0xa0] sm:$0xff]
  %v168 = vld [vmem:[%s0 + $0xa8] sm:$0xff]
  %v169 = vld [vmem:[%s0 + $0xb0] sm:$0xff]
  %v170 = vld [vmem:[%s0 + $0xb8] sm:$0xff]
  %v171 = vld [vmem:[%s0 + $0xc0] sm:$0xff]
  %v172 = vld [vmem:[%s0 + $0xc8] sm:$0xff]
  %v173 = vld [vmem:[%s0 + $0xd0] sm:$0xff]
  %v174 = vld [vmem:[%s0 + $0xd8] sm:$0xff]
  %v175 = vld [vmem:[%s0 + $0xe0] sm:$0xff]
  %v176 = vld [vmem:[%s0 + $0xe8] sm:$0xff]
  %v177 = vld [vmem:[%s0 + $0xf0] sm:$0xff]
  %v178 = vld [vmem:[%s0 + $0xf8] sm:$0xff]
  %s179 = sshra.s32 %s82, 3
  %s180 = sand.u32 %s82, 7
  %s181 = smul.u32 %s179, 2
  %s182 = smul.addr %s181, 4
  %s183 = scalar_lea.vmem %s1, %s182
  %v184 = vld [vmem:[%s183] sm:$0xff]
  %v185 = vld [vmem:[%s183 + $0x8] sm:$0xff]
  %v186 = vld [vmem:[%s183 + $0x10] sm:$0xff]
  %v187 = vld [vmem:[%s183 + $0x18] sm:$0xff]
  %v188 = vld [vmem:[%s183 + $0x20] sm:$0xff]
  %v189 = vld [vmem:[%s183 + $0x28] sm:$0xff]
  %v190 = vld [vmem:[%s183 + $0x30] sm:$0xff]
  %v191 = vld [vmem:[%s183 + $0x38] sm:$0xff]
  %v192 = vld [vmem:[%s183 + $0x40] sm:$0xff]
  %v193 = vld [vmem:[%s183 + $0x48] sm:$0xff]
  %v194 = vld [vmem:[%s183 + $0x50] sm:$0xff]
  %v195 = vld [vmem:[%s183 + $0x58] sm:$0xff]
  %v196 = vld [vmem:[%s183 + $0x60] sm:$0xff]
  %v197 = vld [vmem:[%s183 + $0x68] sm:$0xff]
  %v198 = vld [vmem:[%s183 + $0x70] sm:$0xff]
  %v199 = vld [vmem:[%s183 + $0x78] sm:$0xff]
  %v200 = vld [vmem:[%s183 + $0x80] sm:$0xff]
  %v201 = vld [vmem:[%s183 + $0x88] sm:$0xff]
  %v202 = vld [vmem:[%s183 + $0x90] sm:$0xff]
  %v203 = vld [vmem:[%s183 + $0x98] sm:$0xff]
  %v204 = vld [vmem:[%s183 + $0xa0] sm:$0xff]
  %v205 = vld [vmem:[%s183 + $0xa8] sm:$0xff]
  %v206 = vld [vmem:[%s183 + $0xb0] sm:$0xff]
  %v207 = vld [vmem:[%s183 + $0xb8] sm:$0xff]
  %v208 = vld [vmem:[%s183 + $0xc0] sm:$0xff]
  %v209 = vld [vmem:[%s183 + $0xc8] sm:$0xff]
  %v210 = vld [vmem:[%s183 + $0xd0] sm:$0xff]
  %v211 = vld [vmem:[%s183 + $0xd8] sm:$0xff]
  %v212 = vld [vmem:[%s183 + $0xe0] sm:$0xff]
  %v213 = vld [vmem:[%s183 + $0xe8] sm:$0xff]
  %v214 = vld [vmem:[%s183 + $0xf0] sm:$0xff]
  %v215 = vld [vmem:[%s183 + $0xf8] sm:$0xff]
  %v248 = vunpack.c.l.b16 %v147
  %v249 = vunpack.c.h.b16 %v147
  %v250 = vunpack.c.l.b16 %v148
  %v251 = vunpack.c.h.b16 %v148
  %v252 = vunpack.c.l.b16 %v149
  %v253 = vunpack.c.h.b16 %v149
  %v254 = vunpack.c.l.b16 %v150
  %v255 = vunpack.c.h.b16 %v150
  %v256 = vunpack.c.l.b16 %v151
  %v257 = vunpack.c.h.b16 %v151
  %v258 = vunpack.c.l.b16 %v152
  %v259 = vunpack.c.h.b16 %v152
  %v260 = vunpack.c.l.b16 %v153
  %v261 = vunpack.c.h.b16 %v153
  %v262 = vunpack.c.l.b16 %v154
  %v263 = vunpack.c.h.b16 %v154
  %v264 = vunpack.c.l.b16 %v155
  %v265 = vunpack.c.h.b16 %v155
  %v266 = vunpack.c.l.b16 %v156
  %v267 = vunpack.c.h.b16 %v156
  %v268 = vunpack.c.l.b16 %v157
  %v269 = vunpack.c.h.b16 %v157
  %v270 = vunpack.c.l.b16 %v158
  %v271 = vunpack.c.h.b16 %v158
  %v272 = vunpack.c.l.b16 %v159
  %v273 = vunpack.c.h.b16 %v159
  %v274 = vunpack.c.l.b16 %v160
  %v275 = vunpack.c.h.b16 %v160
  %v276 = vunpack.c.l.b16 %v161
  %v277 = vunpack.c.h.b16 %v161
  %v278 = vunpack.c.l.b16 %v162
  %v279 = vunpack.c.h.b16 %v162
  %v280 = vunpack.c.l.b16 %v163
  %v281 = vunpack.c.h.b16 %v163
  %v282 = vunpack.c.l.b16 %v164
  %v283 = vunpack.c.h.b16 %v164
  %v284 = vunpack.c.l.b16 %v165
  %v285 = vunpack.c.h.b16 %v165
  %v286 = vunpack.c.l.b16 %v166
  %v287 = vunpack.c.h.b16 %v166
  %v288 = vunpack.c.l.b16 %v167
  %v289 = vunpack.c.h.b16 %v167
  %v290 = vunpack.c.l.b16 %v168
  %v291 = vunpack.c.h.b16 %v168
  %v292 = vunpack.c.l.b16 %v169
  %v293 = vunpack.c.h.b16 %v169
  %v294 = vunpack.c.l.b16 %v170
  %v295 = vunpack.c.h.b16 %v170
  %v296 = vunpack.c.l.b16 %v171
  %v297 = vunpack.c.h.b16 %v171
  %v298 = vunpack.c.l.b16 %v172
  %v299 = vunpack.c.h.b16 %v172
  %v300 = vunpack.c.l.b16 %v173
  %v301 = vunpack.c.h.b16 %v173
  %v302 = vunpack.c.l.b16 %v174
  %v303 = vunpack.c.h.b16 %v174
  %v304 = vunpack.c.l.b16 %v175
  %v305 = vunpack.c.h.b16 %v175
  %v306 = vunpack.c.l.b16 %v176
  %v307 = vunpack.c.h.b16 %v176
  %v308 = vunpack.c.l.b16 %v177
  %v309 = vunpack.c.h.b16 %v177
  %v310 = vunpack.c.l.b16 %v178
  %v311 = vunpack.c.h.b16 %v178
  %v312 = vpack.c.b16 %v250, %v248
  %v313 = vpack.c.b16 %v251, %v249
  %v314 = vpack.c.b16 %v254, %v252
  %v315 = vpack.c.b16 %v255, %v253
  %v316 = vpack.c.b16 %v258, %v256
  %v317 = vpack.c.b16 %v259, %v257
  %v318 = vpack.c.b16 %v262, %v260
  %v319 = vpack.c.b16 %v263, %v261
  %v320 = vpack.c.b16 %v266, %v264
  %v321 = vpack.c.b16 %v267, %v265
  %v322 = vpack.c.b16 %v270, %v268
  %v323 = vpack.c.b16 %v271, %v269
  %v324 = vpack.c.b16 %v274, %v272
  %v325 = vpack.c.b16 %v275, %v273
  %v326 = vpack.c.b16 %v278, %v276
  %v327 = vpack.c.b16 %v279, %v277
  %v328 = vpack.c.b16 %v282, %v280
  %v329 = vpack.c.b16 %v283, %v281
  %v330 = vpack.c.b16 %v286, %v284
  %v331 = vpack.c.b16 %v287, %v285
  %v332 = vpack.c.b16 %v290, %v288
  %v333 = vpack.c.b16 %v291, %v289
  %v334 = vpack.c.b16 %v294, %v292
  %v335 = vpack.c.b16 %v295, %v293
  %v336 = vpack.c.b16 %v298, %v296
  %v337 = vpack.c.b16 %v299, %v297
  %v338 = vpack.c.b16 %v302, %v300
  %v339 = vpack.c.b16 %v303, %v301
  %v340 = vpack.c.b16 %v306, %v304
  %v341 = vpack.c.b16 %v307, %v305
  %v342 = vpack.c.b16 %v310, %v308
  %v343 = vpack.c.b16 %v311, %v309
  %v408 = vunpack.c.l.b16 %v184
  %v409 = vunpack.c.h.b16 %v184
  %v410 = vunpack.c.l.b16 %v185
  %v411 = vunpack.c.h.b16 %v185
  %v412 = vunpack.c.l.b16 %v186
  %v413 = vunpack.c.h.b16 %v186
  %v414 = vunpack.c.l.b16 %v187
  %v415 = vunpack.c.h.b16 %v187
  %v416 = vunpack.c.l.b16 %v188
  %v417 = vunpack.c.h.b16 %v188
  %v418 = vunpack.c.l.b16 %v189
  %v419 = vunpack.c.h.b16 %v189
  %v420 = vunpack.c.l.b16 %v190
  %v421 = vunpack.c.h.b16 %v190
  %v422 = vunpack.c.l.b16 %v191
  %v423 = vunpack.c.h.b16 %v191
  %v424 = vunpack.c.l.b16 %v192
  %v425 = vunpack.c.h.b16 %v192
  %v426 = vunpack.c.l.b16 %v193
  %v427 = vunpack.c.h.b16 %v193
  %v428 = vunpack.c.l.b16 %v194
  %v429 = vunpack.c.h.b16 %v194
  %v430 = vunpack.c.l.b16 %v195
  %v431 = vunpack.c.h.b16 %v195
  %v432 = vunpack.c.l.b16 %v196
  %v433 = vunpack.c.h.b16 %v196
  %v434 = vunpack.c.l.b16 %v197
  %v435 = vunpack.c.h.b16 %v197
  %v436 = vunpack.c.l.b16 %v198
  %v437 = vunpack.c.h.b16 %v198
  %v438 = vunpack.c.l.b16 %v199
  %v439 = vunpack.c.h.b16 %v199
  %v440 = vunpack.c.l.b16 %v200
  %v441 = vunpack.c.h.b16 %v200
  %v442 = vunpack.c.l.b16 %v201
  %v443 = vunpack.c.h.b16 %v201
  %v444 = vunpack.c.l.b16 %v202
  %v445 = vunpack.c.h.b16 %v202
  %v446 = vunpack.c.l.b16 %v203
  %v447 = vunpack.c.h.b16 %v203
  %v448 = vunpack.c.l.b16 %v204
  %v449 = vunpack.c.h.b16 %v204
  %v450 = vunpack.c.l.b16 %v205
  %v451 = vunpack.c.h.b16 %v205
  %v452 = vunpack.c.l.b16 %v206
  %v453 = vunpack.c.h.b16 %v206
  %v454 = vunpack.c.l.b16 %v207
  %v455 = vunpack.c.h.b16 %v207
  %v456 = vunpack.c.l.b16 %v208
  %v457 = vunpack.c.h.b16 %v208
  %v458 = vunpack.c.l.b16 %v209
  %v459 = vunpack.c.h.b16 %v209
  %v460 = vunpack.c.l.b16 %v210
  %v461 = vunpack.c.h.b16 %v210
  %v462 = vunpack.c.l.b16 %v211
  %v463 = vunpack.c.h.b16 %v211
  %v464 = vunpack.c.l.b16 %v212
  %v465 = vunpack.c.h.b16 %v212
  %v466 = vunpack.c.l.b16 %v213
  %v467 = vunpack.c.h.b16 %v213
  %v468 = vunpack.c.l.b16 %v214
  %v469 = vunpack.c.h.b16 %v214
  %v470 = vunpack.c.l.b16 %v215
  %v471 = vunpack.c.h.b16 %v215
  %v472 = vpack.c.b16 %v410, %v408
  %v473 = vpack.c.b16 %v411, %v409
  %v474 = vpack.c.b16 %v414, %v412
  %v475 = vpack.c.b16 %v415, %v413
  %v476 = vpack.c.b16 %v418, %v416
  %v477 = vpack.c.b16 %v419, %v417
  %v478 = vpack.c.b16 %v422, %v420
  %v479 = vpack.c.b16 %v423, %v421
  %v480 = vpack.c.b16 %v426, %v424
  %v481 = vpack.c.b16 %v427, %v425
  %v482 = vpack.c.b16 %v430, %v428
  %v483 = vpack.c.b16 %v431, %v429
  %v484 = vpack.c.b16 %v434, %v432
  %v485 = vpack.c.b16 %v435, %v433
  %v486 = vpack.c.b16 %v438, %v436
  %v487 = vpack.c.b16 %v439, %v437
  %v488 = vpack.c.b16 %v442, %v440
  %v489 = vpack.c.b16 %v443, %v441
  %v490 = vpack.c.b16 %v446, %v444
  %v491 = vpack.c.b16 %v447, %v445
  %v492 = vpack.c.b16 %v450, %v448
  %v493 = vpack.c.b16 %v451, %v449
  %v494 = vpack.c.b16 %v454, %v452
  %v495 = vpack.c.b16 %v455, %v453
  %v496 = vpack.c.b16 %v458, %v456
  %v497 = vpack.c.b16 %v459, %v457
  %v498 = vpack.c.b16 %v462, %v460
  %v499 = vpack.c.b16 %v463, %v461
  %v500 = vpack.c.b16 %v466, %v464
  %v501 = vpack.c.b16 %v467, %v465
  %v502 = vpack.c.b16 %v470, %v468
  %v503 = vpack.c.b16 %v471, %v469
  %536 = vmatprep.subr.bf16.mxu0 %v473
  %537 = vmatpush1.bf16.msra.mxu0 %v472
  %538 = vmatprep.subr.bf16.mxu0 %v475
  %539 = vmatpush1.bf16.msra.mxu0 %v474
  %540 = vmatprep.subr.bf16.mxu0 %v477
  %541 = vmatpush1.bf16.msra.mxu0 %v476
  %542 = vmatprep.subr.bf16.mxu0 %v479
  %543 = vmatpush1.bf16.msra.mxu0 %v478
  %544 = vmatprep.subr.bf16.mxu0 %v481
  %545 = vmatpush1.bf16.msra.mxu0 %v480
  %546 = vmatprep.subr.bf16.mxu0 %v483
  %547 = vmatpush1.bf16.msra.mxu0 %v482
  %548 = vmatprep.subr.bf16.mxu0 %v485
  %549 = vmatpush1.bf16.msra.mxu0 %v484
  %550 = vmatprep.subr.bf16.mxu0 %v487
  %551 = vmatpush1.bf16.msra.mxu0 %v486
  %552 = vmatprep.subr.bf16.mxu0 %v489
  %553 = vmatpush1.bf16.msra.mxu0 %v488
  %554 = vmatprep.subr.bf16.mxu0 %v491
  %555 = vmatpush1.bf16.msra.mxu0 %v490
  %556 = vmatprep.subr.bf16.mxu0 %v493
  %557 = vmatpush1.bf16.msra.mxu0 %v492
  %558 = vmatprep.subr.bf16.mxu0 %v495
  %559 = vmatpush1.bf16.msra.mxu0 %v494
  %560 = vmatprep.subr.bf16.mxu0 %v497
  %561 = vmatpush1.bf16.msra.mxu0 %v496
  %562 = vmatprep.subr.bf16.mxu0 %v499
  %563 = vmatpush1.bf16.msra.mxu0 %v498
  %564 = vmatprep.subr.bf16.mxu0 %v501
  %565 = vmatpush1.bf16.msra.mxu0 %v500
  %566 = vmatprep.subr.bf16.mxu0 %v503
  %567 = vmatpush1.bf16.msra.mxu0 %v502
  %568 = vmatprep.mubr.bf16.mxu0 %v313
  %569 = vmatmul.mubr.bf16.gmra.mrb[0].mxu0 %v312
  %v570 = vpop.f32.mrb[0].mxu0
  %v571 = vadd.f32 0.0, %v570
  %v572 = vpop.f32.mrb[0].mxu0
  %v573 = vadd.f32 0.0, %v572
  %v574 = vpop.f32.mrb[0].mxu0
  %v575 = vadd.f32 0.0, %v574
  %v576 = vpop.f32.mrb[0].mxu0
  %v577 = vadd.f32 0.0, %v576
  %578 = vmatprep.mubr.bf16.mxu0 %v315
  %579 = vmatmul.mubr.bf16.gmra.mrb[0].mxu0 %v314
  %v580 = vpop.f32.mrb[0].mxu0
  %v581 = vadd.f32 0.0, %v580
  %v582 = vpop.f32.mrb[0].mxu0
  %v583 = vadd.f32 0.0, %v582
  %v584 = vpop.f32.mrb[0].mxu0
  %v585 = vadd.f32 0.0, %v584
  %v586 = vpop.f32.mrb[0].mxu0
  %v587 = vadd.f32 0.0, %v586
  %588 = vmatprep.mubr.bf16.mxu0 %v317
  %589 = vmatmul.mubr.bf16.gmra.mrb[0].mxu0 %v316
  %v590 = vpop.f32.mrb[0].mxu0
  %v591 = vadd.f32 0.0, %v590
  %v592 = vpop.f32.mrb[0].mxu0
  %v593 = vadd.f32 0.0, %v592
  %v594 = vpop.f32.mrb[0].mxu0
  %v595 = vadd.f32 0.0, %v594
  %v596 = vpop.f32.mrb[0].mxu0
  %v597 = vadd.f32 0.0, %v596
  %598 = vmatprep.mubr.bf16.mxu0 %v319
  %599 = vmatmul.mubr.bf16.gmra.mrb[0].mxu0 %v318
  %v600 = vpop.f32.mrb[0].mxu0
  %v601 = vadd.f32 0.0, %v600
  %v602 = vpop.f32.mrb[0].mxu0
  %v603 = vadd.f32 0.0, %v602
  %v604 = vpop.f32.mrb[0].mxu0
  %v605 = vadd.f32 0.0, %v604
  %v606 = vpop.f32.mrb[0].mxu0
  %v607 = vadd.f32 0.0, %v606
  %608 = vmatprep.mubr.bf16.mxu0 %v321
  %609 = vmatmul.mubr.bf16.gmra.mrb[0].mxu0 %v320
  %v610 = vpop.f32.mrb[0].mxu0
  %v611 = vadd.f32 0.0, %v610
  %v612 = vpop.f32.mrb[0].mxu0
  %v613 = vadd.f32 0.0, %v612
  %v614 = vpop.f32.mrb[0].mxu0
  %v615 = vadd.f32 0.0, %v614
  %v616 = vpop.f32.mrb[0].mxu0
  %v617 = vadd.f32 0.0, %v616
  %618 = vmatprep.mubr.bf16.mxu0 %v323
  %619 = vmatmul.mubr.bf16.gmra.mrb[0].mxu0 %v322
  %v620 = vpop.f32.mrb[0].mxu0
  %v621 = vadd.f32 0.0, %v620
  %v622 = vpop.f32.mrb[0].mxu0
  %v623 = vadd.f32 0.0, %v622
  %v624 = vpop.f32.mrb[0].mxu0
  %v625 = vadd.f32 0.0, %v624
  %v626 = vpop.f32.mrb[0].mxu0
  %v627 = vadd.f32 0.0, %v626
  %628 = vmatprep.mubr.bf16.mxu0 %v325
  %629 = vmatmul.mubr.bf16.gmra.mrb[0].mxu0 %v324
  %v630 = vpop.f32.mrb[0].mxu0
  %v631 = vadd.f32 0.0, %v630
  %v632 = vpop.f32.mrb[0].mxu0
  %v633 = vadd.f32 0.0, %v632
  %v634 = vpop.f32.mrb[0].mxu0
  %v635 = vadd.f32 0.0, %v634
  %v636 = vpop.f32.mrb[0].mxu0
  %v637 = vadd.f32 0.0, %v636
  %638 = vmatprep.mubr.bf16.mxu0 %v327
  %639 = vmatmul.mubr.bf16.gmra.mrb[0].mxu0 %v326
  %v640 = vpop.f32.mrb[0].mxu0
  %v641 = vadd.f32 0.0, %v640
  %v642 = vpop.f32.mrb[0].mxu0
  %v643 = vadd.f32 0.0, %v642
  %v644 = vpop.f32.mrb[0].mxu0
  %v645 = vadd.f32 0.0, %v644
  %v646 = vpop.f32.mrb[0].mxu0
  %v647 = vadd.f32 0.0, %v646
  %648 = vmatprep.mubr.bf16.mxu0 %v329
  %649 = vmatmul.mubr.bf16.gmra.mrb[0].mxu0 %v328
  %v650 = vpop.f32.mrb[0].mxu0
  %v651 = vadd.f32 0.0, %v650
  %v652 = vpop.f32.mrb[0].mxu0
  %v653 = vadd.f32 0.0, %v652
  %v654 = vpop.f32.mrb[0].mxu0
  %v655 = vadd.f32 0.0, %v654
  %v656 = vpop.f32.mrb[0].mxu0
  %v657 = vadd.f32 0.0, %v656
  %658 = vmatprep.mubr.bf16.mxu0 %v331
  %659 = vmatmul.mubr.bf16.gmra.mrb[0].mxu0 %v330
  %v660 = vpop.f32.mrb[0].mxu0
  %v661 = vadd.f32 0.0, %v660
  %v662 = vpop.f32.mrb[0].mxu0
  %v663 = vadd.f32 0.0, %v662
  %v664 = vpop.f32.mrb[0].mxu0
  %v665 = vadd.f32 0.0, %v664
  %v666 = vpop.f32.mrb[0].mxu0
  %v667 = vadd.f32 0.0, %v666
  %668 = vmatprep.mubr.bf16.mxu0 %v333
  %669 = vmatmul.mubr.bf16.gmra.mrb[0].mxu0 %v332
  %v670 = vpop.f32.mrb[0].mxu0
  %v671 = vadd.f32 0.0, %v670
  %v672 = vpop.f32.mrb[0].mxu0
  %v673 = vadd.f32 0.0, %v672
  %v674 = vpop.f32.mrb[0].mxu0
  %v675 = vadd.f32 0.0, %v674
  %v676 = vpop.f32.mrb[0].mxu0
  %v677 = vadd.f32 0.0, %v676
  %678 = vmatprep.mubr.bf16.mxu0 %v335
  %679 = vmatmul.mubr.bf16.gmra.mrb[0].mxu0 %v334
  %v680 = vpop.f32.mrb[0].mxu0
  %v681 = vadd.f32 0.0, %v680
  %v682 = vpop.f32.mrb[0].mxu0
  %v683 = vadd.f32 0.0, %v682
  %v684 = vpop.f32.mrb[0].mxu0
  %v685 = vadd.f32 0.0, %v684
  %v686 = vpop.f32.mrb[0].mxu0
  %v687 = vadd.f32 0.0, %v686
  %688 = vmatprep.mubr.bf16.mxu0 %v337
  %689 = vmatmul.mubr.bf16.gmra.mrb[0].mxu0 %v336
  %v690 = vpop.f32.mrb[0].mxu0
  %v691 = vadd.f32 0.0, %v690
  %v692 = vpop.f32.mrb[0].mxu0
  %v693 = vadd.f32 0.0, %v692
  %v694 = vpop.f32.mrb[0].mxu0
  %v695 = vadd.f32 0.0, %v694
  %v696 = vpop.f32.mrb[0].mxu0
  %v697 = vadd.f32 0.0, %v696
  %698 = vmatprep.mubr.bf16.mxu0 %v339
  %699 = vmatmul.mubr.bf16.gmra.mrb[0].mxu0 %v338
  %v700 = vpop.f32.mrb[0].mxu0
  %v701 = vadd.f32 0.0, %v700
  %v702 = vpop.f32.mrb[0].mxu0
  %v703 = vadd.f32 0.0, %v702
  %v704 = vpop.f32.mrb[0].mxu0
  %v705 = vadd.f32 0.0, %v704
  %v706 = vpop.f32.mrb[0].mxu0
  %v707 = vadd.f32 0.0, %v706
  %708 = vmatprep.mubr.bf16.mxu0 %v341
  %709 = vmatmul.mubr.bf16.gmra.mrb[0].mxu0 %v340
  %v710 = vpop.f32.mrb[0].mxu0
  %v711 = vadd.f32 0.0, %v710
  %v712 = vpop.f32.mrb[0].mxu0
  %v713 = vadd.f32 0.0, %v712
  %v714 = vpop.f32.mrb[0].mxu0
  %v715 = vadd.f32 0.0, %v714
  %v716 = vpop.f32.mrb[0].mxu0
  %v717 = vadd.f32 0.0, %v716
  %718 = vmatprep.mubr.bf16.mxu0 %v343
  %719 = vmatmul.mubr.bf16.gmra.mrb[0].mxu0 %v342
  %v720 = vpop.f32.mrb[0].mxu0
  %v721 = vadd.f32 0.0, %v720
  %v722 = vpop.f32.mrb[0].mxu0
  %v723 = vadd.f32 0.0, %v722
  %v724 = vpop.f32.mrb[0].mxu0
  %v725 = vadd.f32 0.0, %v724
  %v726 = vpop.f32.mrb[0].mxu0
  %v727 = vadd.f32 0.0, %v726
  %728 = vdwg.mxu0
  %v729 = vadd.f32 %v83, %v571
  %v730 = vadd.f32 %v84, %v573
  %v731 = vadd.f32 %v85, %v575
  %v732 = vadd.f32 %v86, %v577
  %v733 = vadd.f32 %v87, %v581
  %v734 = vadd.f32 %v88, %v583
  %v735 = vadd.f32 %v89, %v585
  %v736 = vadd.f32 %v90, %v587
  %v737 = vadd.f32 %v91, %v591
  %v738 = vadd.f32 %v92, %v593
  %v739 = vadd.f32 %v93, %v595
  %v740 = vadd.f32 %v94, %v597
  %v741 = vadd.f32 %v95, %v601
  %v742 = vadd.f32 %v96, %v603
  %v743 = vadd.f32 %v97, %v605
  %v744 = vadd.f32 %v98, %v607
  %v745 = vadd.f32 %v99, %v611
  %v746 = vadd.f32 %v100, %v613
  %v747 = vadd.f32 %v101, %v615
  %v748 = vadd.f32 %v102, %v617
  %v749 = vadd.f32 %v103, %v621
  %v750 = vadd.f32 %v104, %v623
  %v751 = vadd.f32 %v105, %v625
  %v752 = vadd.f32 %v106, %v627
  %v753 = vadd.f32 %v107, %v631
  %v754 = vadd.f32 %v108, %v633
  %v755 = vadd.f32 %v109, %v635
  %v756 = vadd.f32 %v110, %v637
  %v757 = vadd.f32 %v111, %v641
  %v758 = vadd.f32 %v112, %v643
  %v759 = vadd.f32 %v113, %v645
  %v760 = vadd.f32 %v114, %v647
  %v761 = vadd.f32 %v115, %v651
  %v762 = vadd.f32 %v116, %v653
  %v763 = vadd.f32 %v117, %v655
  %v764 = vadd.f32 %v118, %v657
  %v765 = vadd.f32 %v119, %v661
  %v766 = vadd.f32 %v120, %v663
  %v767 = vadd.f32 %v121, %v665
  %v768 = vadd.f32 %v122, %v667
  %v769 = vadd.f32 %v123, %v671
  %v770 = vadd.f32 %v124, %v673
  %v771 = vadd.f32 %v125, %v675
  %v772 = vadd.f32 %v126, %v677
  %v773 = vadd.f32 %v127, %v681
  %v774 = vadd.f32 %v128, %v683
  %v775 = vadd.f32 %v129, %v685
  %v776 = vadd.f32 %v130, %v687
  %v777 = vadd.f32 %v131, %v691
  %v778 = vadd.f32 %v132, %v693
  %v779 = vadd.f32 %v133, %v695
  %v780 = vadd.f32 %v134, %v697
  %v781 = vadd.f32 %v135, %v701
  %v782 = vadd.f32 %v136, %v703
  %v783 = vadd.f32 %v137, %v705
  %v784 = vadd.f32 %v138, %v707
  %v785 = vadd.f32 %v139, %v711
  %v786 = vadd.f32 %v140, %v713
  %v787 = vadd.f32 %v141, %v715
  %v788 = vadd.f32 %v142, %v717
  %v789 = vadd.f32 %v143, %v721
  %v790 = vadd.f32 %v144, %v723
  %v791 = vadd.f32 %v145, %v725
  %v792 = vadd.f32 %v146, %v727
  %793 = vst [vmem:[#allocation2] sm:$0xff] %v729
  %794 = vst [vmem:[#allocation2 + $0x8] sm:$0xff] %v730
  %795 = vst [vmem:[#allocation2 + $0x10] sm:$0xff] %v731
  %796 = vst [vmem:[#allocation2 + $0x18] sm:$0xff] %v732
  %797 = vst [vmem:[#allocation2 + $0x20] sm:$0xff] %v733
  %798 = vst [vmem:[#allocation2 + $0x28] sm:$0xff] %v734
  %799 = vst [vmem:[#allocation2 + $0x30] sm:$0xff] %v735
  %800 = vst [vmem:[#allocation2 + $0x38] sm:$0xff] %v736
  %801 = vst [vmem:[#allocation2 + $0x40] sm:$0xff] %v737
  %802 = vst [vmem:[#allocation2 + $0x48] sm:$0xff] %v738
  %803 = vst [vmem:[#allocation2 + $0x50] sm:$0xff] %v739
  %804 = vst [vmem:[#allocation2 + $0x58] sm:$0xff] %v740
  %805 = vst [vmem:[#allocation2 + $0x60] sm:$0xff] %v741
  %806 = vst [vmem:[#allocation2 + $0x68] sm:$0xff] %v742
  %807 = vst [vmem:[#allocation2 + $0x70] sm:$0xff] %v743
  %808 = vst [vmem:[#allocation2 + $0x78] sm:$0xff] %v744
  %809 = vst [vmem:[#allocation2 + $0x80] sm:$0xff] %v745
  %810 = vst [vmem:[#allocation2 + $0x88] sm:$0xff] %v746
  %811 = vst [vmem:[#allocation2 + $0x90] sm:$0xff] %v747
  %812 = vst [vmem:[#allocation2 + $0x98] sm:$0xff] %v748
  %813 = vst [vmem:[#allocation2 + $0xa0] sm:$0xff] %v749
  %814 = vst [vmem:[#allocation2 + $0xa8] sm:$0xff] %v750
  %815 = vst [vmem:[#allocation2 + $0xb0] sm:$0xff] %v751
  %816 = vst [vmem:[#allocation2 + $0xb8] sm:$0xff] %v752
  %817 = vst [vmem:[#allocation2 + $0xc0] sm:$0xff] %v753
  %818 = vst [vmem:[#allocation2 + $0xc8] sm:$0xff] %v754
  %819 = vst [vmem:[#allocation2 + $0xd0] sm:$0xff] %v755
  %820 = vst [vmem:[#allocation2 + $0xd8] sm:$0xff] %v756
  %821 = vst [vmem:[#allocation2 + $0xe0] sm:$0xff] %v757
  %822 = vst [vmem:[#allocation2 + $0xe8] sm:$0xff] %v758
  %823 = vst [vmem:[#allocation2 + $0xf0] sm:$0xff] %v759
  %824 = vst [vmem:[#allocation2 + $0xf8] sm:$0xff] %v760
  %825 = vst [vmem:[#allocation2 + $0x100] sm:$0xff] %v761
  %826 = vst [vmem:[#allocation2 + $0x108] sm:$0xff] %v762
  %827 = vst [vmem:[#allocation2 + $0x110] sm:$0xff] %v763
  %828 = vst [vmem:[#allocation2 + $0x118] sm:$0xff] %v764
  %829 = vst [vmem:[#allocation2 + $0x120] sm:$0xff] %v765
  %830 = vst [vmem:[#allocation2 + $0x128] sm:$0xff] %v766
  %831 = vst [vmem:[#allocation2 + $0x130] sm:$0xff] %v767
  %832 = vst [vmem:[#allocation2 + $0x138] sm:$0xff] %v768
  %833 = vst [vmem:[#allocation2 + $0x140] sm:$0xff] %v769
  %834 = vst [vmem:[#allocation2 + $0x148] sm:$0xff] %v770
  %835 = vst [vmem:[#allocation2 + $0x150] sm:$0xff] %v771
  %836 = vst [vmem:[#allocation2 + $0x158] sm:$0xff] %v772
  %837 = vst [vmem:[#allocation2 + $0x160] sm:$0xff] %v773
  %838 = vst [vmem:[#allocation2 + $0x168] sm:$0xff] %v774
  %839 = vst [vmem:[#allocation2 + $0x170] sm:$0xff] %v775
  %840 = vst [vmem:[#allocation2 + $0x178] sm:$0xff] %v776
  %841 = vst [vmem:[#allocation2 + $0x180] sm:$0xff] %v777
  %842 = vst [vmem:[#allocation2 + $0x188] sm:$0xff] %v778
  %843 = vst [vmem:[#allocation2 + $0x190] sm:$0xff] %v779
  %844 = vst [vmem:[#allocation2 + $0x198] sm:$0xff] %v780
  %845 = vst [vmem:[#allocation2 + $0x1a0] sm:$0xff] %v781
  %846 = vst [vmem:[#allocation2 + $0x1a8] sm:$0xff] %v782
  %847 = vst [vmem:[#allocation2 + $0x1b0] sm:$0xff] %v783
  %848 = vst [vmem:[#allocation2 + $0x1b8] sm:$0xff] %v784
  %849 = vst [vmem:[#allocation2 + $0x1c0] sm:$0xff] %v785
  %850 = vst [vmem:[#allocation2 + $0x1c8] sm:$0xff] %v786
  %851 = vst [vmem:[#allocation2 + $0x1d0] sm:$0xff] %v787
  %852 = vst [vmem:[#allocation2 + $0x1d8] sm:$0xff] %v788
  %853 = vst [vmem:[#allocation2 + $0x1e0] sm:$0xff] %v789
  %854 = vst [vmem:[#allocation2 + $0x1e8] sm:$0xff] %v790
  %855 = vst [vmem:[#allocation2 + $0x1f0] sm:$0xff] %v791
  %856 = vst [vmem:[#allocation2 + $0x1f8] sm:$0xff] %v792
  // Predicated region
  $region18: #{graph_convolution.3} parent=0 // pred_check
    %p857 = pneg %p14
  $region19: #{graph_convolution.3} parent=0 // pred_check_branch
    %859 = sbr.rel (%p857) target = $region21
  $region20: #{graph_convolution.3} parent=0 // pred_region
    %v860 = vld [vmem:[#allocation2] sm:$0xff]
    %v861 = vld [vmem:[#allocation2 + $0x8] sm:$0xff]
    %v862 = vld [vmem:[#allocation2 + $0x10] sm:$0xff]
    %v863 = vld [vmem:[#allocation2 + $0x18] sm:$0xff]
    %v864 = vld [vmem:[#allocation2 + $0x20] sm:$0xff]
    %v865 = vld [vmem:[#allocation2 + $0x28] sm:$0xff]
    %v866 = vld [vmem:[#allocation2 + $0x30] sm:$0xff]
    %v867 = vld [vmem:[#allocation2 + $0x38] sm:$0xff]
    %v868 = vld [vmem:[#allocation2 + $0x40] sm:$0xff]
    %v869 = vld [vmem:[#allocation2 + $0x48] sm:$0xff]
    %v870 = vld [vmem:[#allocation2 + $0x50] sm:$0xff]
    %v871 = vld [vmem:[#allocation2 + $0x58] sm:$0xff]
    %v872 = vld [vmem:[#allocation2 + $0x60] sm:$0xff]
    %v873 = vld [vmem:[#allocation2 + $0x68] sm:$0xff]
    %v874 = vld [vmem:[#allocation2 + $0x70] sm:$0xff]
    %v875 = vld [vmem:[#allocation2 + $0x78] sm:$0xff]
    %v876 = vld [vmem:[#allocation2 + $0x80] sm:$0xff]
    %v877 = vld [vmem:[#allocation2 + $0x88] sm:$0xff]
    %v878 = vld [vmem:[#allocation2 + $0x90] sm:$0xff]
    %v879 = vld [vmem:[#allocation2 + $0x98] sm:$0xff]
    %v880 = vld [vmem:[#allocation2 + $0xa0] sm:$0xff]
    %v881 = vld [vmem:[#allocation2 + $0xa8] sm:$0xff]
    %v882 = vld [vmem:[#allocation2 + $0xb0] sm:$0xff]
    %v883 = vld [vmem:[#allocation2 + $0xb8] sm:$0xff]
    %v884 = vld [vmem:[#allocation2 + $0xc0] sm:$0xff]
    %v885 = vld [vmem:[#allocation2 + $0xc8] sm:$0xff]
    %v886 = vld [vmem:[#allocation2 + $0xd0] sm:$0xff]
    %v887 = vld [vmem:[#allocation2 + $0xd8] sm:$0xff]
    %v888 = vld [vmem:[#allocation2 + $0xe0] sm:$0xff]
    %v889 = vld [vmem:[#allocation2 + $0xe8] sm:$0xff]
    %v890 = vld [vmem:[#allocation2 + $0xf0] sm:$0xff]
    %v891 = vld [vmem:[#allocation2 + $0xf8] sm:$0xff]
    %v892 = vld [vmem:[#allocation2 + $0x100] sm:$0xff]
    %v893 = vld [vmem:[#allocation2 + $0x108] sm:$0xff]
    %v894 = vld [vmem:[#allocation2 + $0x110] sm:$0xff]
    %v895 = vld [vmem:[#allocation2 + $0x118] sm:$0xff]
    %v896 = vld [vmem:[#allocation2 + $0x120] sm:$0xff]
    %v897 = vld [vmem:[#allocation2 + $0x128] sm:$0xff]
    %v898 = vld [vmem:[#allocation2 + $0x130] sm:$0xff]
    %v899 = vld [vmem:[#allocation2 + $0x138] sm:$0xff]
    %v900 = vld [vmem:[#allocation2 + $0x140] sm:$0xff]
    %v901 = vld [vmem:[#allocation2 + $0x148] sm:$0xff]
    %v902 = vld [vmem:[#allocation2 + $0x150] sm:$0xff]
    %v903 = vld [vmem:[#allocation2 + $0x158] sm:$0xff]
    %v904 = vld [vmem:[#allocation2 + $0x160] sm:$0xff]
    %v905 = vld [vmem:[#allocation2 + $0x168] sm:$0xff]
    %v906 = vld [vmem:[#allocation2 + $0x170] sm:$0xff]
    %v907 = vld [vmem:[#allocation2 + $0x178] sm:$0xff]
    %v908 = vld [vmem:[#allocation2 + $0x180] sm:$0xff]
    %v909 = vld [vmem:[#allocation2 + $0x188] sm:$0xff]
    %v910 = vld [vmem:[#allocation2 + $0x190] sm:$0xff]
    %v911 = vld [vmem:[#allocation2 + $0x198] sm:$0xff]
    %v912 = vld [vmem:[#allocation2 + $0x1a0] sm:$0xff]
    %v913 = vld [vmem:[#allocation2 + $0x1a8] sm:$0xff]
    %v914 = vld [vmem:[#allocation2 + $0x1b0] sm:$0xff]
    %v915 = vld [vmem:[#allocation2 + $0x1b8] sm:$0xff]
    %v916 = vld [vmem:[#allocation2 + $0x1c0] sm:$0xff]
    %v917 = vld [vmem:[#allocation2 + $0x1c8] sm:$0xff]
    %v918 = vld [vmem:[#allocation2 + $0x1d0] sm:$0xff]
    %v919 = vld [vmem:[#allocation2 + $0x1d8] sm:$0xff]
    %v920 = vld [vmem:[#allocation2 + $0x1e0] sm:$0xff]
    %v921 = vld [vmem:[#allocation2 + $0x1e8] sm:$0xff]
    %v922 = vld [vmem:[#allocation2 + $0x1f0] sm:$0xff]
    %v923 = vld [vmem:[#allocation2 + $0x1f8] sm:$0xff]
    %v924 = vld [vmem:[%s2] sm:$0x3]
    %v926 = vlaneseq
    %v927 = vshrl.u32 %v926, 7
    %v928 = vsub.s32 0, %v927
    %v929 = vrot.slane %v924, %v928
    %v930 = vlaneseq
    %v931 = vshrl.u32 %v930, 7
    %v932 = vsub.s32 1, %v931
    %v933 = vrot.slane %v924, %v932
    %v936 = vadd.f32 %v860, %v929
    %v937 = vadd.f32 %v861, %v933
    %v938 = vadd.f32 %v862, %v929
    %v939 = vadd.f32 %v863, %v933
    %v940 = vadd.f32 %v864, %v929
    %v941 = vadd.f32 %v865, %v933
    %v942 = vadd.f32 %v866, %v929
    %v943 = vadd.f32 %v867, %v933
    %v944 = vadd.f32 %v868, %v929
    %v945 = vadd.f32 %v869, %v933
    %v946 = vadd.f32 %v870, %v929
    %v947 = vadd.f32 %v871, %v933
    %v948 = vadd.f32 %v872, %v929
    %v949 = vadd.f32 %v873, %v933
    %v950 = vadd.f32 %v874, %v929
    %v951 = vadd.f32 %v875, %v933
    %v952 = vadd.f32 %v876, %v929
    %v953 = vadd.f32 %v877, %v933
    %v954 = vadd.f32 %v878, %v929
    %v955 = vadd.f32 %v879, %v933
    %v956 = vadd.f32 %v880, %v929
    %v957 = vadd.f32 %v881, %v933
    %v958 = vadd.f32 %v882, %v929
    %v959 = vadd.f32 %v883, %v933
    %v960 = vadd.f32 %v884, %v929
    %v961 = vadd.f32 %v885, %v933
    %v962 = vadd.f32 %v886, %v929
    %v963 = vadd.f32 %v887, %v933
    %v964 = vadd.f32 %v888, %v929
    %v965 = vadd.f32 %v889, %v933
    %v966 = vadd.f32 %v890, %v929
    %v967 = vadd.f32 %v891, %v933
    %v968 = vadd.f32 %v892, %v929
    %v969 = vadd.f32 %v893, %v933
    %v970 = vadd.f32 %v894, %v929
    %v971 = vadd.f32 %v895, %v933
    %v972 = vadd.f32 %v896, %v929
    %v973 = vadd.f32 %v897, %v933
    %v974 = vadd.f32 %v898, %v929
    %v975 = vadd.f32 %v899, %v933
    %v976 = vadd.f32 %v900, %v929
    %v977 = vadd.f32 %v901, %v933
    %v978 = vadd.f32 %v902, %v929
    %v979 = vadd.f32 %v903, %v933
    %v980 = vadd.f32 %v904, %v929
    %v981 = vadd.f32 %v905, %v933
    %v982 = vadd.f32 %v906, %v929
    %v983 = vadd.f32 %v907, %v933
    %v984 = vadd.f32 %v908, %v929
    %v985 = vadd.f32 %v909, %v933
    %v986 = vadd.f32 %v910, %v929
    %v987 = vadd.f32 %v911, %v933
    %v988 = vadd.f32 %v912, %v929
    %v989 = vadd.f32 %v913, %v933
    %v990 = vadd.f32 %v914, %v929
    %v991 = vadd.f32 %v915, %v933
    %v992 = vadd.f32 %v916, %v929
    %v993 = vadd.f32 %v917, %v933
    %v994 = vadd.f32 %v918, %v929
    %v995 = vadd.f32 %v919, %v933
    %v996 = vadd.f32 %v920, %v929
    %v997 = vadd.f32 %v921, %v933
    %v998 = vadd.f32 %v922, %v929
    %v999 = vadd.f32 %v923, %v933
    %1000 = vst [vmem:[%s3] sm:$0xff] %v936
    %1001 = vst [vmem:[%s3 + $0x8] sm:$0xff] %v937
    %1002 = vst [vmem:[%s3 + $0x10] sm:$0xff] %v938
    %1003 = vst [vmem:[%s3 + $0x18] sm:$0xff] %v939
    %1004 = vst [vmem:[%s3 + $0x20] sm:$0xff] %v940
    %1005 = vst [vmem:[%s3 + $0x28] sm:$0xff] %v941
    %1006 = vst [vmem:[%s3 + $0x30] sm:$0xff] %v942
    %1007 = vst [vmem:[%s3 + $0x38] sm:$0xff] %v943
    %1008 = vst [vmem:[%s3 + $0x40] sm:$0xff] %v944
    %1009 = vst [vmem:[%s3 + $0x48] sm:$0xff] %v945
    %1010 = vst [vmem:[%s3 + $0x50] sm:$0xff] %v946
    %1011 = vst [vmem:[%s3 + $0x58] sm:$0xff] %v947
    %1012 = vst [vmem:[%s3 + $0x60] sm:$0xff] %v948
    %1013 = vst [vmem:[%s3 + $0x68] sm:$0xff] %v949
    %1014 = vst [vmem:[%s3 + $0x70] sm:$0xff] %v950
    %1015 = vst [vmem:[%s3 + $0x78] sm:$0xff] %v951
    %1016 = vst [vmem:[%s3 + $0x80] sm:$0xff] %v952
    %1017 = vst [vmem:[%s3 + $0x88] sm:$0xff] %v953
    %1018 = vst [vmem:[%s3 + $0x90] sm:$0xff] %v954
    %1019 = vst [vmem:[%s3 + $0x98] sm:$0xff] %v955
    %1020 = vst [vmem:[%s3 + $0xa0] sm:$0xff] %v956
    %1021 = vst [vmem:[%s3 + $0xa8] sm:$0xff] %v957
    %1022 = vst [vmem:[%s3 + $0xb0] sm:$0xff] %v958
    %1023 = vst [vmem:[%s3 + $0xb8] sm:$0xff] %v959
    %1024 = vst [vmem:[%s3 + $0xc0] sm:$0xff] %v960
    %1025 = vst [vmem:[%s3 + $0xc8] sm:$0xff] %v961
    %1026 = vst [vmem:[%s3 + $0xd0] sm:$0xff] %v962
    %1027 = vst [vmem:[%s3 + $0xd8] sm:$0xff] %v963
    %1028 = vst [vmem:[%s3 + $0xe0] sm:$0xff] %v964
    %1029 = vst [vmem:[%s3 + $0xe8] sm:$0xff] %v965
    %1030 = vst [vmem:[%s3 + $0xf0] sm:$0xff] %v966
    %1031 = vst [vmem:[%s3 + $0xf8] sm:$0xff] %v967
    %1032 = vst [vmem:[%s3 + $0x100] sm:$0xff] %v968
    %1033 = vst [vmem:[%s3 + $0x108] sm:$0xff] %v969
    %1034 = vst [vmem:[%s3 + $0x110] sm:$0xff] %v970
    %1035 = vst [vmem:[%s3 + $0x118] sm:$0xff] %v971
    %1036 = vst [vmem:[%s3 + $0x120] sm:$0xff] %v972
    %1037 = vst [vmem:[%s3 + $0x128] sm:$0xff] %v973
    %1038 = vst [vmem:[%s3 + $0x130] sm:$0xff] %v974
    %1039 = vst [vmem:[%s3 + $0x138] sm:$0xff] %v975
    %1040 = vst [vmem:[%s3 + $0x140] sm:$0xff] %v976
    %1041 = vst [vmem:[%s3 + $0x148] sm:$0xff] %v977
    %1042 = vst [vmem:[%s3 + $0x150] sm:$0xff] %v978
    %1043 = vst [vmem:[%s3 + $0x158] sm:$0xff] %v979
    %1044 = vst [vmem:[%s3 + $0x160] sm:$0xff] %v980
    %1045 = vst [vmem:[%s3 + $0x168] sm:$0xff] %v981
    %1046 = vst [vmem:[%s3 + $0x170] sm:$0xff] %v982
    %1047 = vst [vmem:[%s3 + $0x178] sm:$0xff] %v983
    %1048 = vst [vmem:[%s3 + $0x180] sm:$0xff] %v984
    %1049 = vst [vmem:[%s3 + $0x188] sm:$0xff] %v985
    %1050 = vst [vmem:[%s3 + $0x190] sm:$0xff] %v986
    %1051 = vst [vmem:[%s3 + $0x198] sm:$0xff] %v987
    %1052 = vst [vmem:[%s3 + $0x1a0] sm:$0xff] %v988
    %1053 = vst [vmem:[%s3 + $0x1a8] sm:$0xff] %v989
    %1054 = vst [vmem:[%s3 + $0x1b0] sm:$0xff] %v990
    %1055 = vst [vmem:[%s3 + $0x1b8] sm:$0xff] %v991
    %1056 = vst [vmem:[%s3 + $0x1c0] sm:$0xff] %v992
    %1057 = vst [vmem:[%s3 + $0x1c8] sm:$0xff] %v993
    %1058 = vst [vmem:[%s3 + $0x1d0] sm:$0xff] %v994
    %1059 = vst [vmem:[%s3 + $0x1d8] sm:$0xff] %v995
    %1060 = vst [vmem:[%s3 + $0x1e0] sm:$0xff] %v996
    %1061 = vst [vmem:[%s3 + $0x1e8] sm:$0xff] %v997
    %1062 = vst [vmem:[%s3 + $0x1f0] sm:$0xff] %v998
    %1063 = vst [vmem:[%s3 + $0x1f8] sm:$0xff] %v999
  $region21: #{graph_convolution.3} parent=0 // pred_fallthru
    _
  // Predicated region
  $region22: #{graph_convolution.3} parent=0 // pred_check
    _
  $region23: #{graph_convolution.3} parent=0 // pred_check_branch
    %1065 = sbr.rel (0) target = $region25
  $region24: #{graph_convolution.3} parent=0 // pred_region
    _
  $region25: #{graph_convolution.3} parent=0 // pred_fallthru
    _
  // Predicated region
  $region26: #{graph_convolution.3} parent=0 // pred_check
    _
  $region27: #{graph_convolution.3} parent=0 // pred_check_branch
    %1067 = sbr.rel (0) target = $region29
  $region28: #{graph_convolution.3} parent=0 // pred_region
    _
  $region29: #{graph_convolution.3} parent=0 // pred_fallthru
    _

</llo_original>
